<compile_context>
chip_gen: v6e
topology: v6e:2x2x1
jax: 0.10.0
libtpu: 0.0.40
codegen_flags: <defaults>
</compile_context>

<pallas_src>
import jax
import jax.numpy as jnp
from jax.experimental import pallas as pl
from jax.experimental.pallas import tpu as pltpu

# ---- module hyperparameters (defaults from __init__) ------------------------
N_CHANNELS = 9
TIME_RANGE = 13
D_IN = N_CHANNELS * TIME_RANGE           # 117
H1 = 256
D_MID = (N_CHANNELS * TIME_RANGE) // 2   # 58
H2 = 256
D_OUT = D_IN                             # 117

# ---- lane-dense padded feature dims (last axis multiple of 128) -------------
D_IN_P = 128
D_MID_P = 128
D_OUT_P = 128


def _round_up(n, m):
    return ((n + m - 1) // m) * m


def _pick_tb(b):
    """Pick the batch tile: big multiples of 128 when the batch allows,
    keep grid >= 2 when possible (v7x megacore), tiny aligned tile otherwise."""
    if b >= 1024:
        return 512
    if b >= 512:
        return 256
    if b >= 256:
        return 128
    return _round_up(b, 8)


def _mlp_kernel(x_ref,
                w1_ref, b1_ref,
                w2_ref, b2_ref,
                w3_ref, b3_ref,
                w4_ref, b4_ref,
                out_ref):
    # x / weights are bf16 (MXU operands); accumulate / bias / ReLU in f32.
    x = x_ref[...]

    # ln1 + ReLU   (dropout1 = identity at inference)
    h = jnp.dot(x, w1_ref[...], preferred_element_type=jnp.float32) + b1_ref[...]
    h = jnp.maximum(h, 0.0)

    # ln2 + ReLU   (dropout2 = identity at inference; noise branch omitted)
    h = jnp.dot(h.astype(jnp.bfloat16), w2_ref[...],
                preferred_element_type=jnp.float32) + b2_ref[...]
    h = jnp.maximum(h, 0.0)

    # ln3 + ReLU
    h = jnp.dot(h.astype(jnp.bfloat16), w3_ref[...],
                preferred_element_type=jnp.float32) + b3_ref[...]
    h = jnp.maximum(h, 0.0)

    # ln4
    y = jnp.dot(h.astype(jnp.bfloat16), w4_ref[...],
                preferred_element_type=jnp.float32) + b4_ref[...]
    out_ref[...] = y.astype(out_ref.dtype)


def init_params(key):
    """Raw f32 params matching nn.Linear shapes (weights stored as (in, out))."""
    keys = jax.random.split(key, 8)

    def linear(kw, kb, fan_in, fan_out):
        bound = 1.0 / jnp.sqrt(fan_in)
        w = jax.random.uniform(kw, (fan_in, fan_out), jnp.float32, -bound, bound)
        b = jax.random.uniform(kb, (1, fan_out), jnp.float32, -bound, bound)
        return w, b

    w1, b1 = linear(keys[0], keys[1], D_IN, H1)
    w2, b2 = linear(keys[2], keys[3], H1, D_MID)
    w3, b3 = linear(keys[4], keys[5], D_MID, H2)
    w4, b4 = linear(keys[6], keys[7], H2, D_OUT)
    return dict(w1=w1, b1=b1, w2=w2, b2=b2, w3=w3, b3=b3, w4=w4, b4=b4)


def prepare_params(raw):
    """Zero-pad feature dims to the 128-lane width; weights -> bf16, biases -> f32.
    Padded rows/cols/bias entries are zero, so results are unchanged."""
    def pad2(a, rows, cols):
        return jnp.pad(a, ((0, rows - a.shape[0]), (0, cols - a.shape[1])))

    return dict(
        w1=pad2(raw["w1"], D_IN_P, H1).astype(jnp.bfloat16),
        b1=raw["b1"].astype(jnp.float32),                          # (1, 256)
        w2=pad2(raw["w2"], H1, D_MID_P).astype(jnp.bfloat16),
        b2=pad2(raw["b2"], 1, D_MID_P).astype(jnp.float32),        # (1, 128)
        w3=pad2(raw["w3"], D_MID_P, H2).astype(jnp.bfloat16),
        b3=raw["b3"].astype(jnp.float32),                          # (1, 256)
        w4=pad2(raw["w4"], H2, D_OUT_P).astype(jnp.bfloat16),
        b4=pad2(raw["b4"], 1, D_OUT_P).astype(jnp.float32),        # (1, 128)
    )


def controlnet_autoencoder_forward(x, p):
    """x: (B, 117) f32, p: prepared (padded, bf16-weight) params -> (B, 117) f32."""
    B = x.shape[0]
    tb = _pick_tb(B)
    b_pad = _round_up(B, tb)

    # Pad batch to a tile multiple and features to the lane width; bf16 operand.
    x_p = jnp.zeros((b_pad, D_IN_P), jnp.bfloat16).at[:B, :D_IN].set(
        x.astype(jnp.bfloat16))

    weight_args = (p["w1"], p["b1"], p["w2"], p["b2"],
                   p["w3"], p["b3"], p["w4"], p["b4"])

    def full_spec(shape):
        return pl.BlockSpec(shape, lambda i: (0, 0))

    flops = 2 * B * (D_IN * H1 + H1 * D_MID + D_MID * H2 + H2 * D_OUT)
    bytes_accessed = (x_p.size * 2 + b_pad * D_OUT_P * 4
                      + sum(int(a.size) * a.dtype.itemsize for a in weight_args))

    out_p = pl.pallas_call(
        _mlp_kernel,
        out_shape=jax.ShapeDtypeStruct((b_pad, D_OUT_P), jnp.float32),
        grid_spec=pltpu.PrefetchScalarGridSpec(
            num_scalar_prefetch=0,
            grid=(b_pad // tb,),
            in_specs=[pl.BlockSpec((tb, D_IN_P), lambda i: (i, 0))]
                     + [full_spec(a.shape) for a in weight_args],
            out_specs=pl.BlockSpec((tb, D_OUT_P), lambda i: (i, 0)),
        ),
        compiler_params=pltpu.CompilerParams(
            dimension_semantics=("parallel",)),
        cost_estimate=pl.CostEstimate(
            flops=flops, transcendentals=0, bytes_accessed=bytes_accessed),
    )(x_p, *weight_args)

    return out_p[:B, :D_OUT]


def reference_forward(x, p):
    """Pure-JAX f32 reference using the same (bf16-rounded) weights, unpadded."""
    def w(name, r, c):
        return p[name][:r, :c].astype(jnp.float32)

    def b(name, c):
        return p[name][:, :c].astype(jnp.float32)

    h = jnp.maximum(x @ w("w1", D_IN, H1) + b("b1", H1), 0.0)
    h = jnp.maximum(h @ w("w2", H1, D_MID) + b("b2", D_MID), 0.0)
    h = jnp.maximum(h @ w("w3", D_MID, H2) + b("b3", H2), 0.0)
    return h @ w("w4", H2, D_OUT) + b("b4", D_OUT)


if __name__ == "__main__":
    key = jax.random.PRNGKey(0)
    kp, kx = jax.random.split(key)
    params = prepare_params(init_params(kp))

    B = 256
    x = jax.random.normal(kx, (B, D_IN), dtype=jnp.float32)

    y = controlnet_autoencoder_forward(x, params)
    y = jax.block_until_ready(y)

    y_ref = reference_forward(x, params)
    assert y.shape == (B, D_OUT)
    # bf16 matmul operands with f32 accumulation: allow ~1% numerical drift.
    assert jnp.allclose(y, y_ref, atol=2e-2, rtol=2e-2), "mismatch vs reference"

    # Ragged batch (not a tile multiple) exercises the tail-padding path.
    x2 = x[:100]
    y2 = jax.block_until_ready(controlnet_autoencoder_forward(x2, params))
    assert y2.shape == (100, D_OUT)
    assert jnp.allclose(y2, y_ref[:100], atol=2e-2, rtol=2e-2), "ragged mismatch"

    print("KERNEL_OK")
</pallas_src>

<mosaic_0001>
module attributes {stable_mosaic.version = 11 : i64} {
  func.func @_mlp_kernel(%arg0: i32, %arg1: memref<128x128xbf16, #tpu.memory_space<vmem>>, %arg2: memref<128x256xbf16, #tpu.memory_space<vmem>>, %arg3: memref<1x256xf32, #tpu.memory_space<vmem>>, %arg4: memref<256x128xbf16, #tpu.memory_space<vmem>>, %arg5: memref<1x128xf32, #tpu.memory_space<vmem>>, %arg6: memref<128x256xbf16, #tpu.memory_space<vmem>>, %arg7: memref<1x256xf32, #tpu.memory_space<vmem>>, %arg8: memref<256x128xbf16, #tpu.memory_space<vmem>>, %arg9: memref<1x128xf32, #tpu.memory_space<vmem>>, %arg10: memref<128x128xf32, #tpu.memory_space<vmem>>) attributes {dimension_semantics = [#tpu.dimension_semantics<parallel>], iteration_bounds = array<i64: 2>, scalar_prefetch = 0 : i64, scratch_operands = 0 : i64, tpu.core_type = #tpu.core_type<tc>, window_params = [{transform_indices = @transform_0, window_bounds = array<i64: 128, 128>}, {pipeline_mode = #tpu.pipeline_mode<synchronous>, transform_indices = @transform_1, window_bounds = array<i64: 128, 256>}, {pipeline_mode = #tpu.pipeline_mode<synchronous>, transform_indices = @transform_2, window_bounds = array<i64: 1, 256>}, {pipeline_mode = #tpu.pipeline_mode<synchronous>, transform_indices = @transform_3, window_bounds = array<i64: 256, 128>}, {pipeline_mode = #tpu.pipeline_mode<synchronous>, transform_indices = @transform_4, window_bounds = array<i64: 1, 128>}, {pipeline_mode = #tpu.pipeline_mode<synchronous>, transform_indices = @transform_5, window_bounds = array<i64: 128, 256>}, {pipeline_mode = #tpu.pipeline_mode<synchronous>, transform_indices = @transform_6, window_bounds = array<i64: 1, 256>}, {pipeline_mode = #tpu.pipeline_mode<synchronous>, transform_indices = @transform_7, window_bounds = array<i64: 256, 128>}, {pipeline_mode = #tpu.pipeline_mode<synchronous>, transform_indices = @transform_8, window_bounds = array<i64: 1, 128>}, {transform_indices = @transform_9, window_bounds = array<i64: 128, 128>}]} {
    %c0 = arith.constant 0 : index
    %c0_0 = arith.constant 0 : index
    %0 = vector.load %arg1[%c0, %c0_0] : memref<128x128xbf16, #tpu.memory_space<vmem>>, vector<128x128xbf16>
    %c0_1 = arith.constant 0 : index
    %c0_2 = arith.constant 0 : index
    %1 = vector.load %arg2[%c0_1, %c0_2] : memref<128x256xbf16, #tpu.memory_space<vmem>>, vector<128x256xbf16>
    %cst = arith.constant dense<0.000000e+00> : vector<128x256xf32>
    %2 = tpu.matmul %0, %1, %cst {dimension_numbers = #tpu.dot_dimension_numbers<[1], [0], [0], [1], [0, 0, 1, 1], [], []>} : vector<128x128xbf16>, vector<128x256xbf16>, vector<128x256xf32> -> vector<128x256xf32>
    %c0_3 = arith.constant 0 : index
    %c0_4 = arith.constant 0 : index
    %3 = vector.load %arg3[%c0_3, %c0_4] : memref<1x256xf32, #tpu.memory_space<vmem>>, vector<1x256xf32>
    %4 = vector.broadcast %3 : vector<1x256xf32> to vector<128x256xf32>
    %5 = arith.addf %2, %4 : vector<128x256xf32>
    %cst_5 = arith.constant 0.000000e+00 : f32
    %6 = vector.broadcast %cst_5 : f32 to vector<128x256xf32>
    %7 = arith.maximumf %5, %6 : vector<128x256xf32>
    %8 = arith.truncf %7 : vector<128x256xf32> to vector<128x256xbf16>
    %c0_6 = arith.constant 0 : index
    %c0_7 = arith.constant 0 : index
    %9 = vector.load %arg4[%c0_6, %c0_7] : memref<256x128xbf16, #tpu.memory_space<vmem>>, vector<256x128xbf16>
    %cst_8 = arith.constant dense<0.000000e+00> : vector<128x128xf32>
    %10 = tpu.matmul %8, %9, %cst_8 {dimension_numbers = #tpu.dot_dimension_numbers<[1], [0], [0], [1], [0, 0, 1, 1], [], []>} : vector<128x256xbf16>, vector<256x128xbf16>, vector<128x128xf32> -> vector<128x128xf32>
    %c0_9 = arith.constant 0 : index
    %c0_10 = arith.constant 0 : index
    %11 = vector.load %arg5[%c0_9, %c0_10] : memref<1x128xf32, #tpu.memory_space<vmem>>, vector<1x128xf32>
    %12 = vector.broadcast %11 : vector<1x128xf32> to vector<128x128xf32>
    %13 = arith.addf %10, %12 : vector<128x128xf32>
    %cst_11 = arith.constant 0.000000e+00 : f32
    %14 = vector.broadcast %cst_11 : f32 to vector<128x128xf32>
    %15 = arith.maximumf %13, %14 : vector<128x128xf32>
    %16 = arith.truncf %15 : vector<128x128xf32> to vector<128x128xbf16>
    %c0_12 = arith.constant 0 : index
    %c0_13 = arith.constant 0 : index
    %17 = vector.load %arg6[%c0_12, %c0_13] : memref<128x256xbf16, #tpu.memory_space<vmem>>, vector<128x256xbf16>
    %cst_14 = arith.constant dense<0.000000e+00> : vector<128x256xf32>
    %18 = tpu.matmul %16, %17, %cst_14 {dimension_numbers = #tpu.dot_dimension_numbers<[1], [0], [0], [1], [0, 0, 1, 1], [], []>} : vector<128x128xbf16>, vector<128x256xbf16>, vector<128x256xf32> -> vector<128x256xf32>
    %c0_15 = arith.constant 0 : index
    %c0_16 = arith.constant 0 : index
    %19 = vector.load %arg7[%c0_15, %c0_16] : memref<1x256xf32, #tpu.memory_space<vmem>>, vector<1x256xf32>
    %20 = vector.broadcast %19 : vector<1x256xf32> to vector<128x256xf32>
    %21 = arith.addf %18, %20 : vector<128x256xf32>
    %cst_17 = arith.constant 0.000000e+00 : f32
    %22 = vector.broadcast %cst_17 : f32 to vector<128x256xf32>
    %23 = arith.maximumf %21, %22 : vector<128x256xf32>
    %24 = arith.truncf %23 : vector<128x256xf32> to vector<128x256xbf16>
    %c0_18 = arith.constant 0 : index
    %c0_19 = arith.constant 0 : index
    %25 = vector.load %arg8[%c0_18, %c0_19] : memref<256x128xbf16, #tpu.memory_space<vmem>>, vector<256x128xbf16>
    %cst_20 = arith.constant dense<0.000000e+00> : vector<128x128xf32>
    %26 = tpu.matmul %24, %25, %cst_20 {dimension_numbers = #tpu.dot_dimension_numbers<[1], [0], [0], [1], [0, 0, 1, 1], [], []>} : vector<128x256xbf16>, vector<256x128xbf16>, vector<128x128xf32> -> vector<128x128xf32>
    %c0_21 = arith.constant 0 : index
    %c0_22 = arith.constant 0 : index
    %27 = vector.load %arg9[%c0_21, %c0_22] : memref<1x128xf32, #tpu.memory_space<vmem>>, vector<1x128xf32>
    %28 = vector.broadcast %27 : vector<1x128xf32> to vector<128x128xf32>
    %29 = arith.addf %26, %28 : vector<128x128xf32>
    %c0_23 = arith.constant 0 : index
    %c0_24 = arith.constant 0 : index
    %30 = vector.load %arg10[%c0_23, %c0_24] : memref<128x128xf32, #tpu.memory_space<vmem>>, vector<128x128xf32>
    tpu.vector_store %arg10[%c0_23, %c0_24], %29 {strides = array<i32>} : memref<128x128xf32, #tpu.memory_space<vmem>>, vector<128x128xf32>,
    return
  }
  func.func @transform_0(%arg0: i32) -> (i32, i32) {
    %c0_i32 = arith.constant 0 : i32
    %c0_i32_0 = arith.constant 0 : i32
    return %arg0, %c0_i32 : i32, i32
  }
  func.func @transform_1(%arg0: i32) -> (i32, i32) {
    %c0_i32 = arith.constant 0 : i32
    %c0_i32_0 = arith.constant 0 : i32
    %c0_i32_1 = arith.constant 0 : i32
    return %c0_i32, %c0_i32_0 : i32, i32
  }
  func.func @transform_2(%arg0: i32) -> (i32, i32) {
    %c0_i32 = arith.constant 0 : i32
    %c0_i32_0 = arith.constant 0 : i32
    %c0_i32_1 = arith.constant 0 : i32
    return %c0_i32, %c0_i32_0 : i32, i32
  }
  func.func @transform_3(%arg0: i32) -> (i32, i32) {
    %c0_i32 = arith.constant 0 : i32
    %c0_i32_0 = arith.constant 0 : i32
    %c0_i32_1 = arith.constant 0 : i32
    return %c0_i32, %c0_i32_0 : i32, i32
  }
  func.func @transform_4(%arg0: i32) -> (i32, i32) {
    %c0_i32 = arith.constant 0 : i32
    %c0_i32_0 = arith.constant 0 : i32
    %c0_i32_1 = arith.constant 0 : i32
    return %c0_i32, %c0_i32_0 : i32, i32
  }
  func.func @transform_5(%arg0: i32) -> (i32, i32) {
    %c0_i32 = arith.constant 0 : i32
    %c0_i32_0 = arith.constant 0 : i32
    %c0_i32_1 = arith.constant 0 : i32
    return %c0_i32, %c0_i32_0 : i32, i32
  }
  func.func @transform_6(%arg0: i32) -> (i32, i32) {
    %c0_i32 = arith.constant 0 : i32
    %c0_i32_0 = arith.constant 0 : i32
    %c0_i32_1 = arith.constant 0 : i32
    return %c0_i32, %c0_i32_0 : i32, i32
  }
  func.func @transform_7(%arg0: i32) -> (i32, i32) {
    %c0_i32 = arith.constant 0 : i32
    %c0_i32_0 = arith.constant 0 : i32
    %c0_i32_1 = arith.constant 0 : i32
    return %c0_i32, %c0_i32_0 : i32, i32
  }
  func.func @transform_8(%arg0: i32) -> (i32, i32) {
    %c0_i32 = arith.constant 0 : i32
    %c0_i32_0 = arith.constant 0 : i32
    %c0_i32_1 = arith.constant 0 : i32
    return %c0_i32, %c0_i32_0 : i32, i32
  }
  func.func @transform_9(%arg0: i32) -> (i32, i32) {
    %c0_i32 = arith.constant 0 : i32
    %c0_i32_0 = arith.constant 0 : i32
    return %arg0, %c0_i32 : i32, i32
  }
}

</mosaic_0001>

<llo_original>
// kernel: tpu_custom_call.1
$region0: #{tpu_custom_call.1}
  #allocation0 [shape = 'u32[]', space=smem, size = 0x4, offset = 0x4, fixed_abs, tag = 'smem constant byte address 0x4 - core index']
  #allocation1 [shape = 'u32[144,128]{1,0:T(1,128)}', space=vmem, size = 0x12000, scoped, tag = 'internal scratch']
  %s0 = inlined_call_operand.hbm [shape: bf16[256,128], index: 0, kind: input, shape index: {}]
  %s1 = inlined_call_operand.hbm [shape: bf16[128,256], index: 1, kind: input, shape index: {}]
  %s2 = inlined_call_operand.vmem [shape: f32[1,256], index: 2, kind: input, shape index: {}]
  %s3 = inlined_call_operand.hbm [shape: bf16[256,128], index: 3, kind: input, shape index: {}]
  %s4 = inlined_call_operand.vmem [shape: f32[1,128], index: 4, kind: input, shape index: {}]
  %s5 = inlined_call_operand.hbm [shape: bf16[128,256], index: 5, kind: input, shape index: {}]
  %s6 = inlined_call_operand.vmem [shape: f32[1,256], index: 6, kind: input, shape index: {}]
  %s7 = inlined_call_operand.hbm [shape: bf16[256,128], index: 7, kind: input, shape index: {}]
  %s8 = inlined_call_operand.vmem [shape: f32[1,128], index: 8, kind: input, shape index: {}]
  %s9 = inlined_call_operand.hbm [shape: f32[256,128], index: 9, kind: output, shape index: {}]
  %s10 = sld [smem:[#allocation0]]
  $region89: #{tpu_custom_call.1} parent=0
    _
  %s12 = ssub.s32 1, %s10
  %s13 = scalar_select 0, %s12, %s10
  $region1: #{tpu_custom_call.1} parent=0
    #allocation2 [shape = 'u8[65536]{0}', space=vmem, size = 0x10000, scoped, tag = 'input window, operand 0']
    #allocation3 [shape = 's32[2]{0}', space=sflag, size = 0x8, scoped, tag = 'scoped memory for tpu_custom_call.1']
    #allocation4 [shape = 's32[2]{0}', space=sflag, size = 0x8, scoped, tag = 'scoped memory for tpu_custom_call.1']
    #allocation5 [shape = 'u8[65536]{0}', space=vmem, size = 0x10000, scoped, tag = 'input window, operand 1, single buffered']
    #allocation6 [shape = 's32[1]{0}', space=sflag, size = 0x4, scoped, tag = 'scoped memory for tpu_custom_call.1']
    #allocation7 [shape = 'u8[65536]{0}', space=vmem, size = 0x10000, scoped, tag = 'input window, operand 3, single buffered']
    #allocation8 [shape = 'u8[65536]{0}', space=vmem, size = 0x10000, scoped, tag = 'input window, operand 5, single buffered']
    #allocation9 [shape = 's32[1]{0}', space=sflag, size = 0x4, scoped, tag = 'scoped memory for tpu_custom_call.1']
    #allocation10 [shape = 'u8[65536]{0}', space=vmem, size = 0x10000, scoped, tag = 'input window, operand 7, single buffered']
    #allocation11 [shape = 'u8[131072]{0}', space=vmem, size = 0x20000, scoped, tag = 'output window, operand 0']
    %14 = vsyncpa [#allocation3], 0
    %s15 = scalar_lea.sflag [#allocation3], 1
    %16 = vsyncpa %s15, 0
    %17 = vsyncpa [#allocation6], 0
    %18 = vsyncpa [#allocation9], 0
    %19 = vsyncpa [#allocation4], 0
    %s20 = scalar_lea.sflag [#allocation4], 1
    %21 = vsyncpa %s20, 0
    loop: start=0, step=1, limit=4
    $region2: #{tpu_custom_call.1} parent=1 // loop_pre_header
      _
    $region3: #{tpu_custom_call.1} parent=1 // loop_header
      %s23 = sphi 0, %s27
      %p24 = scmp.ge.s32.totalorder %s23, 4
      %s33 = sphi 0, %s35
      %s36 = sphi 0, %s33
      %s37 = sphi 0, %s36
      %s53 = sphi 0, %s37
      %s57 = sphi 0, %s57
      %s59 = sphi 0, %s57
      %s60 = sphi 0, %s59
      %s74 = sphi 0, %s60
      %s78 = sphi 0, %s78
      %s80 = sphi 0, %s78
      %s81 = sphi 0, %s80
      %s95 = sphi 0, %s81
      %s99 = sphi 0, %s99
      %s101 = sphi 0, %s99
      %s102 = sphi 0, %s101
      %s116 = sphi 0, %s102
      %s120 = sphi 0, %s120
      %s122 = sphi 0, %s120
      %s123 = sphi 0, %s122
      %s137 = sphi 0, %s123
      %s141 = sphi 0, %s141
      %s143 = sphi 0, %s141
      %s144 = sphi 0, %s143
      %s158 = sphi 0, %s144
      %s162 = sphi 0, %s162
      %s164 = sphi 0, %s162
      %s165 = sphi 0, %s164
      %s179 = sphi 0, %s165
      %s183 = sphi 0, %s183
      %s185 = sphi 0, %s183
      %s186 = sphi 0, %s185
      %s200 = sphi 0, %s186
      %s204 = sphi 0, %s204
      %s206 = sphi 0, %s204
      %s207 = sphi 0, %s206
      %s221 = sphi 0, %s207
      %s227 = sphi 0, %s229
      %s230 = sphi 0, %s227
      %s231 = sphi 0, %s230
      %s247 = sphi 0, %s231
    $region4: #{tpu_custom_call.1} parent=1 // loop_header_branch
      %26 = sbr.rel (%p24) target = $region8
    $region5: #{tpu_custom_call.1} parent=1 // loop_body
      %s28 = ssub.s32 %s23, 1
      %s29 = ssub.s32 %s23, 2
      %s30 = sadd.s32 %s23, 1
      %s31 = ssub.s32 %s23, %s30
      %p32 = scmp.eq.s32.totalorder %s31, 0
      %s34 = sadd.s32 %s33, 1
      %s35 = scalar_select %p32, %s33, %s34
      %p38 = pneg %p32
      %p39 = scmp.eq.s32.totalorder %s23, 1
      %p40 = por %p38, %p39
      %p41 = scmp.ne.s32.totalorder %s33, %s36
      %p42 = scmp.eq.s32.totalorder %s23, 0
      %p43 = por %p41, %p42
      %p44 = scmp.ne.s32.totalorder %s33, %s36
      %p45 = scmp.eq.s32.totalorder %s28, 1
      %p46 = por %p44, %p45
      %p47 = scmp.ne.s32.totalorder %s36, %s37
      %p48 = scmp.eq.s32.totalorder %s28, 0
      %p49 = por %p47, %p48
      %p50 = scmp.ne.s32.totalorder %s36, %s37
      %p51 = scmp.eq.s32.totalorder %s29, 1
      %p52 = por %p50, %p51
      %p54 = scmp.ne.s32.totalorder %s37, %s53
      %p55 = scmp.eq.s32.totalorder %s29, 0
      %p56 = por %p54, %p55
      %s58 = sadd.s32 %s57, 1
      %p61 = scmp.eq.s32.totalorder %s23, 1
      %p62 = scmp.ne.s32.totalorder %s57, %s59
      %p63 = scmp.eq.s32.totalorder %s23, 0
      %p64 = por %p62, %p63
      %p65 = scmp.ne.s32.totalorder %s57, %s59
      %p66 = scmp.eq.s32.totalorder %s28, 1
      %p67 = por %p65, %p66
      %p68 = scmp.ne.s32.totalorder %s59, %s60
      %p69 = scmp.eq.s32.totalorder %s28, 0
      %p70 = por %p68, %p69
      %p71 = scmp.ne.s32.totalorder %s59, %s60
      %p72 = scmp.eq.s32.totalorder %s29, 1
      %p73 = por %p71, %p72
      %p75 = scmp.ne.s32.totalorder %s60, %s74
      %p76 = scmp.eq.s32.totalorder %s29, 0
      %p77 = por %p75, %p76
      %s79 = sadd.s32 %s78, 1
      %p82 = scmp.eq.s32.totalorder %s23, 1
      %p83 = scmp.ne.s32.totalorder %s78, %s80
      %p84 = scmp.eq.s32.totalorder %s23, 0
      %p85 = por %p83, %p84
      %p86 = scmp.ne.s32.totalorder %s78, %s80
      %p87 = scmp.eq.s32.totalorder %s28, 1
      %p88 = por %p86, %p87
      %p89 = scmp.ne.s32.totalorder %s80, %s81
      %p90 = scmp.eq.s32.totalorder %s28, 0
      %p91 = por %p89, %p90
      %p92 = scmp.ne.s32.totalorder %s80, %s81
      %p93 = scmp.eq.s32.totalorder %s29, 1
      %p94 = por %p92, %p93
      %p96 = scmp.ne.s32.totalorder %s81, %s95
      %p97 = scmp.eq.s32.totalorder %s29, 0
      %p98 = por %p96, %p97
      %s100 = sadd.s32 %s99, 1
      %p103 = scmp.eq.s32.totalorder %s23, 1
      %p104 = scmp.ne.s32.totalorder %s99, %s101
      %p105 = scmp.eq.s32.totalorder %s23, 0
      %p106 = por %p104, %p105
      %p107 = scmp.ne.s32.totalorder %s99, %s101
      %p108 = scmp.eq.s32.totalorder %s28, 1
      %p109 = por %p107, %p108
      %p110 = scmp.ne.s32.totalorder %s101, %s102
      %p111 = scmp.eq.s32.totalorder %s28, 0
      %p112 = por %p110, %p111
      %p113 = scmp.ne.s32.totalorder %s101, %s102
      %p114 = scmp.eq.s32.totalorder %s29, 1
      %p115 = por %p113, %p114
      %p117 = scmp.ne.s32.totalorder %s102, %s116
      %p118 = scmp.eq.s32.totalorder %s29, 0
      %p119 = por %p117, %p118
      %s121 = sadd.s32 %s120, 1
      %p124 = scmp.eq.s32.totalorder %s23, 1
      %p125 = scmp.ne.s32.totalorder %s120, %s122
      %p126 = scmp.eq.s32.totalorder %s23, 0
      %p127 = por %p125, %p126
      %p128 = scmp.ne.s32.totalorder %s120, %s122
      %p129 = scmp.eq.s32.totalorder %s28, 1
      %p130 = por %p128, %p129
      %p131 = scmp.ne.s32.totalorder %s122, %s123
      %p132 = scmp.eq.s32.totalorder %s28, 0
      %p133 = por %p131, %p132
      %p134 = scmp.ne.s32.totalorder %s122, %s123
      %p135 = scmp.eq.s32.totalorder %s29, 1
      %p136 = por %p134, %p135
      %p138 = scmp.ne.s32.totalorder %s123, %s137
      %p139 = scmp.eq.s32.totalorder %s29, 0
      %p140 = por %p138, %p139
      %s142 = sadd.s32 %s141, 1
      %p145 = scmp.eq.s32.totalorder %s23, 1
      %p146 = scmp.ne.s32.totalorder %s141, %s143
      %p147 = scmp.eq.s32.totalorder %s23, 0
      %p148 = por %p146, %p147
      %p149 = scmp.ne.s32.totalorder %s141, %s143
      %p150 = scmp.eq.s32.totalorder %s28, 1
      %p151 = por %p149, %p150
      %p152 = scmp.ne.s32.totalorder %s143, %s144
      %p153 = scmp.eq.s32.totalorder %s28, 0
      %p154 = por %p152, %p153
      %p155 = scmp.ne.s32.totalorder %s143, %s144
      %p156 = scmp.eq.s32.totalorder %s29, 1
      %p157 = por %p155, %p156
      %p159 = scmp.ne.s32.totalorder %s144, %s158
      %p160 = scmp.eq.s32.totalorder %s29, 0
      %p161 = por %p159, %p160
      %s163 = sadd.s32 %s162, 1
      %p166 = scmp.eq.s32.totalorder %s23, 1
      %p167 = scmp.ne.s32.totalorder %s162, %s164
      %p168 = scmp.eq.s32.totalorder %s23, 0
      %p169 = por %p167, %p168
      %p170 = scmp.ne.s32.totalorder %s162, %s164
      %p171 = scmp.eq.s32.totalorder %s28, 1
      %p172 = por %p170, %p171
      %p173 = scmp.ne.s32.totalorder %s164, %s165
      %p174 = scmp.eq.s32.totalorder %s28, 0
      %p175 = por %p173, %p174
      %p176 = scmp.ne.s32.totalorder %s164, %s165
      %p177 = scmp.eq.s32.totalorder %s29, 1
      %p178 = por %p176, %p177
      %p180 = scmp.ne.s32.totalorder %s165, %s179
      %p181 = scmp.eq.s32.totalorder %s29, 0
      %p182 = por %p180, %p181
      %s184 = sadd.s32 %s183, 1
      %p187 = scmp.eq.s32.totalorder %s23, 1
      %p188 = scmp.ne.s32.totalorder %s183, %s185
      %p189 = scmp.eq.s32.totalorder %s23, 0
      %p190 = por %p188, %p189
      %p191 = scmp.ne.s32.totalorder %s183, %s185
      %p192 = scmp.eq.s32.totalorder %s28, 1
      %p193 = por %p191, %p192
      %p194 = scmp.ne.s32.totalorder %s185, %s186
      %p195 = scmp.eq.s32.totalorder %s28, 0
      %p196 = por %p194, %p195
      %p197 = scmp.ne.s32.totalorder %s185, %s186
      %p198 = scmp.eq.s32.totalorder %s29, 1
      %p199 = por %p197, %p198
      %p201 = scmp.ne.s32.totalorder %s186, %s200
      %p202 = scmp.eq.s32.totalorder %s29, 0
      %p203 = por %p201, %p202
      %s205 = sadd.s32 %s204, 1
      %p208 = scmp.eq.s32.totalorder %s23, 1
      %p209 = scmp.ne.s32.totalorder %s204, %s206
      %p210 = scmp.eq.s32.totalorder %s23, 0
      %p211 = por %p209, %p210
      %p212 = scmp.ne.s32.totalorder %s204, %s206
      %p213 = scmp.eq.s32.totalorder %s28, 1
      %p214 = por %p212, %p213
      %p215 = scmp.ne.s32.totalorder %s206, %s207
      %p216 = scmp.eq.s32.totalorder %s28, 0
      %p217 = por %p215, %p216
      %p218 = scmp.ne.s32.totalorder %s206, %s207
      %p219 = scmp.eq.s32.totalorder %s29, 1
      %p220 = por %p218, %p219
      %p222 = scmp.ne.s32.totalorder %s207, %s221
      %p223 = scmp.eq.s32.totalorder %s29, 0
      %p224 = por %p222, %p223
      %s225 = ssub.s32 %s23, %s30
      %p226 = scmp.eq.s32.totalorder %s225, 0
      %s228 = sadd.s32 %s227, 1
      %s229 = scalar_select %p226, %s227, %s228
      %p232 = pneg %p226
      %p233 = scmp.eq.s32.totalorder %s23, 1
      %p234 = por %p232, %p233
      %p235 = scmp.ne.s32.totalorder %s227, %s230
      %p236 = scmp.eq.s32.totalorder %s23, 0
      %p237 = por %p235, %p236
      %p238 = scmp.ne.s32.totalorder %s227, %s230
      %p239 = scmp.eq.s32.totalorder %s28, 1
      %p240 = por %p238, %p239
      %p241 = scmp.ne.s32.totalorder %s230, %s231
      %p242 = scmp.eq.s32.totalorder %s28, 0
      %p243 = por %p241, %p242
      %p244 = scmp.ne.s32.totalorder %s230, %s231
      %p245 = scmp.eq.s32.totalorder %s29, 1
      %p246 = por %p244, %p245
      %p248 = scmp.ne.s32.totalorder %s231, %s247
      %p249 = scmp.eq.s32.totalorder %s29, 0
      %p250 = por %p248, %p249
      %p251 = scmp.le.s32.totalorder 1, %s23
      %p252 = scmp.lt.s32.totalorder %s23, 3
      %p253 = pnand %p251, %p252
      %p254 = pneg %p253
      // Predicated region
      $region9: #{tpu_custom_call.1} parent=5 // pred_check
        _
      $region10: #{tpu_custom_call.1} parent=5 // pred_check_branch
        %256 = sbr.rel (%p253) target = $region12
      $region11: #{tpu_custom_call.1} parent=5 // pred_region
        %s257 = ssub.s32 %s23, 1
        // Predicated region
        $region13: #{tpu_custom_call.1} parent=11 // pred_check
          %p258 = pneg %p70
        $region14: #{tpu_custom_call.1} parent=11 // pred_check_branch
          %260 = sbr.rel (%p258) target = $region16
        $region15: #{tpu_custom_call.1} parent=11 // pred_region
          %s262 = ssub.s32 2048, 2048
          %263 = vsyncadd [#allocation6], %s262
          %s264 = sshll.u32 [#allocation5], 4
          %s265 = int_to_ptr.vmem [resolvable:$true] %s264
          %270 = dma.hbm_to_vmem [thread:$0]  %s1, 2048, %s265, [#allocation6], 128, 128, 8
        $region16: #{tpu_custom_call.1} parent=11 // pred_fallthru
          _
        // Predicated region
        $region17: #{tpu_custom_call.1} parent=11 // pred_check
          %p271 = pneg %p91
        $region18: #{tpu_custom_call.1} parent=11 // pred_check_branch
          %273 = sbr.rel (%p271) target = $region20
        $region19: #{tpu_custom_call.1} parent=11 // pred_region
          _
        $region20: #{tpu_custom_call.1} parent=11 // pred_fallthru
          _
        // Predicated region
        $region21: #{tpu_custom_call.1} parent=11 // pred_check
          %p274 = pneg %p112
        $region22: #{tpu_custom_call.1} parent=11 // pred_check_branch
          %276 = sbr.rel (%p274) target = $region24
        $region23: #{tpu_custom_call.1} parent=11 // pred_region
          %s278 = ssub.s32 2048, 2048
          %279 = vsyncadd [#allocation6], %s278
          %s280 = sshll.u32 [#allocation7], 4
          %s281 = int_to_ptr.vmem [resolvable:$true] %s280
          %286 = dma.hbm_to_vmem [thread:$0]  %s3, 2048, %s281, [#allocation6], 64, 64, 4
        $region24: #{tpu_custom_call.1} parent=11 // pred_fallthru
          _
        // Predicated region
        $region25: #{tpu_custom_call.1} parent=11 // pred_check
          %p287 = pneg %p133
        $region26: #{tpu_custom_call.1} parent=11 // pred_check_branch
          %289 = sbr.rel (%p287) target = $region28
        $region27: #{tpu_custom_call.1} parent=11 // pred_region
          _
        $region28: #{tpu_custom_call.1} parent=11 // pred_fallthru
          _
        // Predicated region
        $region29: #{tpu_custom_call.1} parent=11 // pred_check
          %p290 = pneg %p154
        $region30: #{tpu_custom_call.1} parent=11 // pred_check_branch
          %292 = sbr.rel (%p290) target = $region32
        $region31: #{tpu_custom_call.1} parent=11 // pred_region
          %s294 = ssub.s32 2048, 2048
          %295 = vsyncadd [#allocation9], %s294
          %s296 = sshll.u32 [#allocation8], 4
          %s297 = int_to_ptr.vmem [resolvable:$true] %s296
          %302 = dma.hbm_to_vmem [thread:$0]  %s5, 2048, %s297, [#allocation9], 128, 128, 8
        $region32: #{tpu_custom_call.1} parent=11 // pred_fallthru
          _
        // Predicated region
        $region33: #{tpu_custom_call.1} parent=11 // pred_check
          %p303 = pneg %p175
        $region34: #{tpu_custom_call.1} parent=11 // pred_check_branch
          %305 = sbr.rel (%p303) target = $region36
        $region35: #{tpu_custom_call.1} parent=11 // pred_region
          _
        $region36: #{tpu_custom_call.1} parent=11 // pred_fallthru
          _
        // Predicated region
        $region37: #{tpu_custom_call.1} parent=11 // pred_check
          %p306 = pneg %p196
        $region38: #{tpu_custom_call.1} parent=11 // pred_check_branch
          %308 = sbr.rel (%p306) target = $region40
        $region39: #{tpu_custom_call.1} parent=11 // pred_region
          %s310 = ssub.s32 2048, 2048
          %311 = vsyncadd [#allocation9], %s310
          %s312 = sshll.u32 [#allocation10], 4
          %s313 = int_to_ptr.vmem [resolvable:$true] %s312
          %318 = dma.hbm_to_vmem [thread:$0]  %s7, 2048, %s313, [#allocation9], 64, 64, 4
        $region40: #{tpu_custom_call.1} parent=11 // pred_fallthru
          _
        // Predicated region
        $region41: #{tpu_custom_call.1} parent=11 // pred_check
          %p319 = pneg %p217
        $region42: #{tpu_custom_call.1} parent=11 // pred_check_branch
          %321 = sbr.rel (%p319) target = $region44
        $region43: #{tpu_custom_call.1} parent=11 // pred_region
          _
        $region44: #{tpu_custom_call.1} parent=11 // pred_fallthru
          _
      $region12: #{tpu_custom_call.1} parent=5 // pred_fallthru
        _
      %p322 = scmp.lt.s32.totalorder %s23, 2
      // Predicated region
      $region45: #{tpu_custom_call.1} parent=5 // pred_check
        %p323 = pneg %p322
      $region46: #{tpu_custom_call.1} parent=5 // pred_check_branch
        %325 = sbr.rel (%p323) target = $region48
      $region47: #{tpu_custom_call.1} parent=5 // pred_region
        // Predicated region
        $region49: #{tpu_custom_call.1} parent=47 // pred_check
          %p326 = pneg %p43
        $region50: #{tpu_custom_call.1} parent=47 // pred_check_branch
          %328 = sbr.rel (%p326) target = $region52
        $region51: #{tpu_custom_call.1} parent=47 // pred_region
          %s329 = sand.u32 %s33, 1
          %s330 = scalar_lea.sflag [#allocation3], %s329
          %s331 = sand.u32 %s33, 1
          %s332 = smul.addr %s331, 64
          %s333 = scalar_lea.vmem [#allocation2], %s332
          %s334 = smul.u32 16, %s23
          %s336 = ssub.s32 1024, 1024
          %337 = vsyncadd %s330, %s336
          %s338 = smul.addr %s334, 64
          %s339 = scalar_lea.hbm %s0, %s338
          %s340 = sshll.u32 %s333, 4
          %s341 = int_to_ptr.vmem [resolvable:$true] %s340
          %346 = dma.hbm_to_vmem [thread:$0]  %s339, 1024, %s341, %s330, 64, 64, 4
        $region52: #{tpu_custom_call.1} parent=47 // pred_fallthru
          _
      $region48: #{tpu_custom_call.1} parent=5 // pred_fallthru
        _
      %p347 = scmp.le.s32.totalorder 1, %s23
      %p348 = scmp.lt.s32.totalorder %s23, 3
      %p349 = pnand %p347, %p348
      %p350 = pneg %p349
      // Predicated region
      $region53: #{tpu_custom_call.1} parent=5 // pred_check
        _
      $region54: #{tpu_custom_call.1} parent=5 // pred_check_branch
        %352 = sbr.rel (%p349) target = $region56
      $region55: #{tpu_custom_call.1} parent=5 // pred_region
        %s353 = ssub.s32 %s23, 1
        %s354 = sand.u32 %s36, 1
        %s355 = scalar_lea.sflag [#allocation3], %s354
        %s356 = sand.u32 %s36, 1
        %s357 = smul.addr %s356, 64
        %s358 = scalar_lea.vmem [#allocation2], %s357
        // Predicated region
        $region57: #{tpu_custom_call.1} parent=55 // pred_check
          %p359 = pneg %p49
        $region58: #{tpu_custom_call.1} parent=55 // pred_check_branch
          %361 = sbr.rel (%p359) target = $region60
        $region59: #{tpu_custom_call.1} parent=55 // pred_region
          %362 = dma.done %s355, 1024
        $region60: #{tpu_custom_call.1} parent=55 // pred_fallthru
          _
        // Predicated region
        $region61: #{tpu_custom_call.1} parent=55 // pred_check
          %p363 = pneg %p70
        $region62: #{tpu_custom_call.1} parent=55 // pred_check_branch
          %365 = sbr.rel (%p363) target = $region64
        $region63: #{tpu_custom_call.1} parent=55 // pred_region
          %366 = dma.done [#allocation6], 2048
        $region64: #{tpu_custom_call.1} parent=55 // pred_fallthru
          _
        // Predicated region
        $region65: #{tpu_custom_call.1} parent=55 // pred_check
          %p367 = pneg %p112
        $region66: #{tpu_custom_call.1} parent=55 // pred_check_branch
          %369 = sbr.rel (%p367) target = $region68
        $region67: #{tpu_custom_call.1} parent=55 // pred_region
          %370 = dma.done [#allocation6], 2048
        $region68: #{tpu_custom_call.1} parent=55 // pred_fallthru
          _
        // Predicated region
        $region69: #{tpu_custom_call.1} parent=55 // pred_check
          %p371 = pneg %p154
        $region70: #{tpu_custom_call.1} parent=55 // pred_check_branch
          %373 = sbr.rel (%p371) target = $region72
        $region71: #{tpu_custom_call.1} parent=55 // pred_region
          %374 = dma.done [#allocation9], 2048
        $region72: #{tpu_custom_call.1} parent=55 // pred_fallthru
          _
        // Predicated region
        $region73: #{tpu_custom_call.1} parent=55 // pred_check
          %p375 = pneg %p196
        $region74: #{tpu_custom_call.1} parent=55 // pred_check_branch
          %377 = sbr.rel (%p375) target = $region76
        $region75: #{tpu_custom_call.1} parent=55 // pred_region
          %378 = dma.done [#allocation9], 2048
        $region76: #{tpu_custom_call.1} parent=55 // pred_fallthru
          _
        %s379 = sand.u32 %s36, 1
        %s380 = scalar_lea.sflag [#allocation3], %s379
        %s381 = sand.u32 %s36, 1
        %s382 = smul.addr %s381, 64
        %s383 = scalar_lea.vmem [#allocation2], %s382
        %p384 = pneg %p49
        %p385 = pneg %p46
        %p386 = pneg %p70
        %p387 = pneg %p67
        %p388 = pneg %p91
        %p389 = pneg %p88
        %p390 = pneg %p112
        %p391 = pneg %p109
        %p392 = pneg %p133
        %p393 = pneg %p130
        %p394 = pneg %p154
        %p395 = pneg %p151
        %p396 = pneg %p175
        %p397 = pneg %p172
        %p398 = pneg %p196
        %p399 = pneg %p193
        %p400 = pneg %p217
        %p401 = pneg %p214
        %p402 = pneg %p243
        %p403 = pneg %p240
        %s404 = sand.u32 %s230, 1
        %s405 = scalar_lea.sflag [#allocation4], %s404
        %s406 = sand.u32 %s230, 1
        %s407 = smul.addr %s406, 128
        %s408 = scalar_lea.vmem [#allocation11], %s407
        %s409 = smul.u32 16, %s28
        %s410 = smul.u32 16, %s28
        %v412 = vld [vmem:[%s358] sm:$0xf]
        %v413 = vld [vmem:[%s358 + $0x4] sm:$0xf]
        %v414 = vld [vmem:[%s358 + $0x8] sm:$0xf]
        %v415 = vld [vmem:[%s358 + $0xc] sm:$0xf]
        %v416 = vld [vmem:[%s358 + $0x10] sm:$0xf]
        %v417 = vld [vmem:[%s358 + $0x14] sm:$0xf]
        %v418 = vld [vmem:[%s358 + $0x18] sm:$0xf]
        %v419 = vld [vmem:[%s358 + $0x1c] sm:$0xf]
        %v420 = vld [vmem:[%s358 + $0x20] sm:$0xf]
        %v421 = vld [vmem:[%s358 + $0x24] sm:$0xf]
        %v422 = vld [vmem:[%s358 + $0x28] sm:$0xf]
        %v423 = vld [vmem:[%s358 + $0x2c] sm:$0xf]
        %v424 = vld [vmem:[%s358 + $0x30] sm:$0xf]
        %v425 = vld [vmem:[%s358 + $0x34] sm:$0xf]
        %v426 = vld [vmem:[%s358 + $0x38] sm:$0xf]
        %v427 = vld [vmem:[%s358 + $0x3c] sm:$0xf]
        %v428 = vld [vmem:[#allocation5] sm:$0xff]
        %v429 = vld [vmem:[#allocation5 + $0x8] sm:$0xff]
        %v430 = vld [vmem:[#allocation5 + $0x10] sm:$0xff]
        %v431 = vld [vmem:[#allocation5 + $0x18] sm:$0xff]
        %v432 = vld [vmem:[#allocation5 + $0x20] sm:$0xff]
        %v433 = vld [vmem:[#allocation5 + $0x28] sm:$0xff]
        %v434 = vld [vmem:[#allocation5 + $0x30] sm:$0xff]
        %v435 = vld [vmem:[#allocation5 + $0x38] sm:$0xff]
        %v436 = vld [vmem:[#allocation5 + $0x40] sm:$0xff]
        %v437 = vld [vmem:[#allocation5 + $0x48] sm:$0xff]
        %v438 = vld [vmem:[#allocation5 + $0x50] sm:$0xff]
        %v439 = vld [vmem:[#allocation5 + $0x58] sm:$0xff]
        %v440 = vld [vmem:[#allocation5 + $0x60] sm:$0xff]
        %v441 = vld [vmem:[#allocation5 + $0x68] sm:$0xff]
        %v442 = vld [vmem:[#allocation5 + $0x70] sm:$0xff]
        %v443 = vld [vmem:[#allocation5 + $0x78] sm:$0xff]
        %v444 = vld [vmem:[%s2] sm:$0x3]
        %v446 = vlaneseq
        %v447 = vshrl.u32 %v446, 7
        %v448 = vsub.s32 0, %v447
        %v449 = vrot.slane %v444, %v448
        %v450 = vlaneseq
        %v451 = vshrl.u32 %v450, 7
        %v452 = vsub.s32 1, %v451
        %v453 = vrot.slane %v444, %v452
        %v472 = vunpack.c.l.b16 %v412
        %v473 = vunpack.c.l.b16 %v413
        %v474 = vunpack.c.l.b16 %v414
        %v475 = vunpack.c.l.b16 %v415
        %v476 = vunpack.c.l.b16 %v416
        %v477 = vunpack.c.l.b16 %v417
        %v478 = vunpack.c.l.b16 %v418
        %v479 = vunpack.c.l.b16 %v419
        %v480 = vunpack.c.l.b16 %v420
        %v481 = vunpack.c.l.b16 %v421
        %v482 = vunpack.c.l.b16 %v422
        %v483 = vunpack.c.l.b16 %v423
        %v484 = vunpack.c.l.b16 %v424
        %v485 = vunpack.c.l.b16 %v425
        %v486 = vunpack.c.l.b16 %v426
        %v487 = vunpack.c.l.b16 %v427
        %v488 = vpack.c.b16 %v473, %v472
        %v489 = vpack.c.b16 %v475, %v474
        %v490 = vpack.c.b16 %v477, %v476
        %v491 = vpack.c.b16 %v479, %v478
        %v492 = vpack.c.b16 %v481, %v480
        %v493 = vpack.c.b16 %v483, %v482
        %v494 = vpack.c.b16 %v485, %v484
        %v495 = vpack.c.b16 %v487, %v486
        %v520 = vunpack.c.l.b16 %v428
        %v521 = vunpack.c.h.b16 %v428
        %v522 = vunpack.c.l.b16 %v429
        %v523 = vunpack.c.h.b16 %v429
        %v524 = vunpack.c.l.b16 %v430
        %v525 = vunpack.c.h.b16 %v430
        %v526 = vunpack.c.l.b16 %v431
        %v527 = vunpack.c.h.b16 %v431
        %v528 = vunpack.c.l.b16 %v432
        %v529 = vunpack.c.h.b16 %v432
        %v530 = vunpack.c.l.b16 %v433
        %v531 = vunpack.c.h.b16 %v433
        %v532 = vunpack.c.l.b16 %v434
        %v533 = vunpack.c.h.b16 %v434
        %v534 = vunpack.c.l.b16 %v435
        %v535 = vunpack.c.h.b16 %v435
        %v536 = vunpack.c.l.b16 %v436
        %v537 = vunpack.c.h.b16 %v436
        %v538 = vunpack.c.l.b16 %v437
        %v539 = vunpack.c.h.b16 %v437
        %v540 = vunpack.c.l.b16 %v438
        %v541 = vunpack.c.h.b16 %v438
        %v542 = vunpack.c.l.b16 %v439
        %v543 = vunpack.c.h.b16 %v439
        %v544 = vunpack.c.l.b16 %v440
        %v545 = vunpack.c.h.b16 %v440
        %v546 = vunpack.c.l.b16 %v441
        %v547 = vunpack.c.h.b16 %v441
        %v548 = vunpack.c.l.b16 %v442
        %v549 = vunpack.c.h.b16 %v442
        %v550 = vunpack.c.l.b16 %v443
        %v551 = vunpack.c.h.b16 %v443
        %v552 = vpack.c.b16 %v522, %v520
        %v553 = vpack.c.b16 %v523, %v521
        %v554 = vpack.c.b16 %v526, %v524
        %v555 = vpack.c.b16 %v527, %v525
        %v556 = vpack.c.b16 %v530, %v528
        %v557 = vpack.c.b16 %v531, %v529
        %v558 = vpack.c.b16 %v534, %v532
        %v559 = vpack.c.b16 %v535, %v533
        %v560 = vpack.c.b16 %v538, %v536
        %v561 = vpack.c.b16 %v539, %v537
        %v562 = vpack.c.b16 %v542, %v540
        %v563 = vpack.c.b16 %v543, %v541
        %v564 = vpack.c.b16 %v546, %v544
        %v565 = vpack.c.b16 %v547, %v545
        %v566 = vpack.c.b16 %v550, %v548
        %v567 = vpack.c.b16 %v551, %v549
        %584 = vmatprep.subr.bf16.mxu0 %v567
        %585 = vmatpush1.bf16.msra.mxu0 %v566
        %586 = vmatprep.subr.bf16.mxu0 %v565
        %587 = vmatpush1.bf16.msra.mxu0 %v564
        %588 = vmatprep.subr.bf16.mxu0 %v563
        %589 = vmatpush1.bf16.msra.mxu0 %v562
        %590 = vmatprep.subr.bf16.mxu0 %v561
        %591 = vmatpush1.bf16.msra.mxu0 %v560
        %592 = vmatprep.subr.bf16.mxu0 %v559
        %593 = vmatpush1.bf16.msra.mxu0 %v558
        %594 = vmatprep.subr.bf16.mxu0 %v557
        %595 = vmatpush1.bf16.msra.mxu0 %v556
        %596 = vmatprep.subr.bf16.mxu0 %v555
        %597 = vmatpush1.bf16.msra.mxu0 %v554
        %598 = vmatprep.subr.bf16.mxu0 %v553
        %599 = vmatpush1.bf16.msra.mxu0 %v552
        %600 = vmatprep.subr.bf16.mxu0 0
        %601 = vmatpush2.bf16.msra.mxu0 0
        %602 = vmatprep.subr.bf16.mxu0 0
        %603 = vmatpush2.bf16.msra.mxu0 0
        %604 = vmatprep.subr.bf16.mxu0 0
        %605 = vmatpush2.bf16.msra.mxu0 0
        %606 = vmatprep.subr.bf16.mxu0 0
        %607 = vmatpush2.bf16.msra.mxu0 0
        %608 = vmatprep.subr.bf16.mxu0 0
        %609 = vmatpush2.bf16.msra.mxu0 0
        %610 = vmatprep.subr.bf16.mxu0 0
        %611 = vmatpush2.bf16.msra.mxu0 0
        %612 = vmatprep.subr.bf16.mxu0 0
        %613 = vmatpush2.bf16.msra.mxu0 0
        %614 = vmatprep.subr.bf16.mxu0 0
        %615 = vmatpush2.bf16.msra.mxu0 0
        %616 = vmatprep.mubr.bf16.mxu0 0
        %617 = vmatmul.mubr.bf16.gmra.mxu0 %v488
        %v618 = vpop.f32.mrf.mxu0
        %v619 = vadd.f32 %v449, %v618
        %v620 = vpop.f32.mrf.mxu0
        %v621 = vadd.f32 %v453, %v620
        %v622 = vpop.f32.mrf.mxu0
        %v623 = vadd.f32 %v449, %v622
        %v624 = vpop.f32.mrf.mxu0
        %v625 = vadd.f32 %v453, %v624
        %626 = vmatprep.mubr.bf16.mxu0 0
        %627 = vmatmul.mubr.bf16.gmra.mxu0 %v489
        %v628 = vpop.f32.mrf.mxu0
        %v629 = vadd.f32 %v449, %v628
        %v630 = vpop.f32.mrf.mxu0
        %v631 = vadd.f32 %v453, %v630
        %v632 = vpop.f32.mrf.mxu0
        %v633 = vadd.f32 %v449, %v632
        %v634 = vpop.f32.mrf.mxu0
        %v635 = vadd.f32 %v453, %v634
        %636 = vmatprep.mubr.bf16.mxu0 0
        %637 = vmatmul.mubr.bf16.gmra.mxu0 %v490
        %v638 = vpop.f32.mrf.mxu0
        %v639 = vadd.f32 %v449, %v638
        %v640 = vpop.f32.mrf.mxu0
        %v641 = vadd.f32 %v453, %v640
        %v642 = vpop.f32.mrf.mxu0
        %v643 = vadd.f32 %v449, %v642
        %v644 = vpop.f32.mrf.mxu0
        %v645 = vadd.f32 %v453, %v644
        %646 = vmatprep.mubr.bf16.mxu0 0
        %647 = vmatmul.mubr.bf16.gmra.mxu0 %v491
        %v648 = vpop.f32.mrf.mxu0
        %v649 = vadd.f32 %v449, %v648
        %v650 = vpop.f32.mrf.mxu0
        %v651 = vadd.f32 %v453, %v650
        %v652 = vpop.f32.mrf.mxu0
        %v653 = vadd.f32 %v449, %v652
        %v654 = vpop.f32.mrf.mxu0
        %v655 = vadd.f32 %v453, %v654
        %656 = vmatprep.mubr.bf16.mxu0 0
        %657 = vmatmul.mubr.bf16.gmra.mxu0 %v492
        %v658 = vpop.f32.mrf.mxu0
        %v659 = vadd.f32 %v449, %v658
        %v660 = vpop.f32.mrf.mxu0
        %v661 = vadd.f32 %v453, %v660
        %v662 = vpop.f32.mrf.mxu0
        %v663 = vadd.f32 %v449, %v662
        %v664 = vpop.f32.mrf.mxu0
        %v665 = vadd.f32 %v453, %v664
        %666 = vmatprep.mubr.bf16.mxu0 0
        %667 = vmatmul.mubr.bf16.gmra.mxu0 %v493
        %v668 = vpop.f32.mrf.mxu0
        %v669 = vadd.f32 %v449, %v668
        %v670 = vpop.f32.mrf.mxu0
        %v671 = vadd.f32 %v453, %v670
        %v672 = vpop.f32.mrf.mxu0
        %v673 = vadd.f32 %v449, %v672
        %v674 = vpop.f32.mrf.mxu0
        %v675 = vadd.f32 %v453, %v674
        %676 = vmatprep.mubr.bf16.mxu0 0
        %677 = vmatmul.mubr.bf16.gmra.mxu0 %v494
        %v678 = vpop.f32.mrf.mxu0
        %v679 = vadd.f32 %v449, %v678
        %v680 = vpop.f32.mrf.mxu0
        %v681 = vadd.f32 %v453, %v680
        %v682 = vpop.f32.mrf.mxu0
        %v683 = vadd.f32 %v449, %v682
        %v684 = vpop.f32.mrf.mxu0
        %v685 = vadd.f32 %v453, %v684
        %686 = vmatprep.mubr.bf16.mxu0 0
        %687 = vmatmul.mubr.bf16.gmra.mxu0 %v495
        %v688 = vpop.f32.mrf.mxu0
        %v689 = vadd.f32 %v449, %v688
        %v690 = vpop.f32.mrf.mxu0
        %v691 = vadd.f32 %v453, %v690
        %v692 = vpop.f32.mrf.mxu0
        %v693 = vadd.f32 %v449, %v692
        %v694 = vpop.f32.mrf.mxu0
        %v695 = vadd.f32 %v453, %v694
        %696 = vdwg.mxu0
        %v697 = vmax.f32 %v619, 0.0
        %v698 = vmax.f32 %v621, 0.0
        %v699 = vmax.f32 %v623, 0.0
        %v700 = vmax.f32 %v625, 0.0
        %v701 = vmax.f32 %v629, 0.0
        %v702 = vmax.f32 %v631, 0.0
        %v703 = vmax.f32 %v633, 0.0
        %v704 = vmax.f32 %v635, 0.0
        %v705 = vmax.f32 %v639, 0.0
        %v706 = vmax.f32 %v641, 0.0
        %v707 = vmax.f32 %v643, 0.0
        %v708 = vmax.f32 %v645, 0.0
        %v709 = vmax.f32 %v649, 0.0
        %v710 = vmax.f32 %v651, 0.0
        %v711 = vmax.f32 %v653, 0.0
        %v712 = vmax.f32 %v655, 0.0
        %v713 = vmax.f32 %v659, 0.0
        %v714 = vmax.f32 %v661, 0.0
        %v715 = vmax.f32 %v663, 0.0
        %v716 = vmax.f32 %v665, 0.0
        %v717 = vmax.f32 %v669, 0.0
        %v718 = vmax.f32 %v671, 0.0
        %v719 = vmax.f32 %v673, 0.0
        %v720 = vmax.f32 %v675, 0.0
        %v721 = vmax.f32 %v679, 0.0
        %v722 = vmax.f32 %v681, 0.0
        %v723 = vmax.f32 %v683, 0.0
        %v724 = vmax.f32 %v685, 0.0
        %v725 = vmax.f32 %v689, 0.0
        %v726 = vmax.f32 %v691, 0.0
        %v727 = vmax.f32 %v693, 0.0
        %v728 = vmax.f32 %v695, 0.0
        %v729 = vpack.c.bf16 %v699, %v697
        %v730 = vpack.c.bf16 %v700, %v698
        %v731 = vpack.c.bf16 %v703, %v701
        %v732 = vpack.c.bf16 %v704, %v702
        %v733 = vpack.c.bf16 %v707, %v705
        %v734 = vpack.c.bf16 %v708, %v706
        %v735 = vpack.c.bf16 %v711, %v709
        %v736 = vpack.c.bf16 %v712, %v710
        %v737 = vpack.c.bf16 %v715, %v713
        %v738 = vpack.c.bf16 %v716, %v714
        %v739 = vpack.c.bf16 %v719, %v717
        %v740 = vpack.c.bf16 %v720, %v718
        %v741 = vpack.c.bf16 %v723, %v721
        %v742 = vpack.c.bf16 %v724, %v722
        %v743 = vpack.c.bf16 %v727, %v725
        %v744 = vpack.c.bf16 %v728, %v726
        %v745 = vld [vmem:[#allocation7] sm:$0xf]
        %v746 = vld [vmem:[#allocation7 + $0x4] sm:$0xf]
        %v747 = vld [vmem:[#allocation7 + $0x8] sm:$0xf]
        %v748 = vld [vmem:[#allocation7 + $0xc] sm:$0xf]
        %v749 = vld [vmem:[#allocation7 + $0x10] sm:$0xf]
        %v750 = vld [vmem:[#allocation7 + $0x14] sm:$0xf]
        %v751 = vld [vmem:[#allocation7 + $0x18] sm:$0xf]
        %v752 = vld [vmem:[#allocation7 + $0x1c] sm:$0xf]
        %v753 = vld [vmem:[#allocation7 + $0x20] sm:$0xf]
        %v754 = vld [vmem:[#allocation7 + $0x24] sm:$0xf]
        %v755 = vld [vmem:[#allocation7 + $0x28] sm:$0xf]
        %v756 = vld [vmem:[#allocation7 + $0x2c] sm:$0xf]
        %v757 = vld [vmem:[#allocation7 + $0x30] sm:$0xf]
        %v758 = vld [vmem:[#allocation7 + $0x34] sm:$0xf]
        %v759 = vld [vmem:[#allocation7 + $0x38] sm:$0xf]
        %v760 = vld [vmem:[#allocation7 + $0x3c] sm:$0xf]
        %v761 = vld [vmem:[#allocation7 + $0x40] sm:$0xf]
        %v762 = vld [vmem:[#allocation7 + $0x44] sm:$0xf]
        %v763 = vld [vmem:[#allocation7 + $0x48] sm:$0xf]
        %v764 = vld [vmem:[#allocation7 + $0x4c] sm:$0xf]
        %v765 = vld [vmem:[#allocation7 + $0x50] sm:$0xf]
        %v766 = vld [vmem:[#allocation7 + $0x54] sm:$0xf]
        %v767 = vld [vmem:[#allocation7 + $0x58] sm:$0xf]
        %v768 = vld [vmem:[#allocation7 + $0x5c] sm:$0xf]
        %v769 = vld [vmem:[#allocation7 + $0x60] sm:$0xf]
        %v770 = vld [vmem:[#allocation7 + $0x64] sm:$0xf]
        %v771 = vld [vmem:[#allocation7 + $0x68] sm:$0xf]
        %v772 = vld [vmem:[#allocation7 + $0x6c] sm:$0xf]
        %v773 = vld [vmem:[#allocation7 + $0x70] sm:$0xf]
        %v774 = vld [vmem:[#allocation7 + $0x74] sm:$0xf]
        %v775 = vld [vmem:[#allocation7 + $0x78] sm:$0xf]
        %v776 = vld [vmem:[#allocation7 + $0x7c] sm:$0xf]
        %v777 = vld [vmem:[%s4] sm:$0x1]
        %v779 = vlaneseq
        %v780 = vshrl.u32 %v779, 7
        %v781 = vsub.s32 0, %v780
        %v782 = vrot.slane %v777, %v781
        %v816 = vunpack.c.l.b16 %v745
        %v817 = vunpack.c.l.b16 %v746
        %v818 = vunpack.c.l.b16 %v747
        %v819 = vunpack.c.l.b16 %v748
        %v820 = vunpack.c.l.b16 %v749
        %v821 = vunpack.c.l.b16 %v750
        %v822 = vunpack.c.l.b16 %v751
        %v823 = vunpack.c.l.b16 %v752
        %v824 = vunpack.c.l.b16 %v753
        %v825 = vunpack.c.l.b16 %v754
        %v826 = vunpack.c.l.b16 %v755
        %v827 = vunpack.c.l.b16 %v756
        %v828 = vunpack.c.l.b16 %v757
        %v829 = vunpack.c.l.b16 %v758
        %v830 = vunpack.c.l.b16 %v759
        %v831 = vunpack.c.l.b16 %v760
        %v832 = vunpack.c.l.b16 %v761
        %v833 = vunpack.c.l.b16 %v762
        %v834 = vunpack.c.l.b16 %v763
        %v835 = vunpack.c.l.b16 %v764
        %v836 = vunpack.c.l.b16 %v765
        %v837 = vunpack.c.l.b16 %v766
        %v838 = vunpack.c.l.b16 %v767
        %v839 = vunpack.c.l.b16 %v768
        %v840 = vunpack.c.l.b16 %v769
        %v841 = vunpack.c.l.b16 %v770
        %v842 = vunpack.c.l.b16 %v771
        %v843 = vunpack.c.l.b16 %v772
        %v844 = vunpack.c.l.b16 %v773
        %v845 = vunpack.c.l.b16 %v774
        %v846 = vunpack.c.l.b16 %v775
        %v847 = vunpack.c.l.b16 %v776
        %v848 = vpack.c.b16 %v817, %v816
        %v849 = vpack.c.b16 %v819, %v818
        %v850 = vpack.c.b16 %v821, %v820
        %v851 = vpack.c.b16 %v823, %v822
        %v852 = vpack.c.b16 %v825, %v824
        %v853 = vpack.c.b16 %v827, %v826
        %v854 = vpack.c.b16 %v829, %v828
        %v855 = vpack.c.b16 %v831, %v830
        %v856 = vpack.c.b16 %v833, %v832
        %v857 = vpack.c.b16 %v835, %v834
        %v858 = vpack.c.b16 %v837, %v836
        %v859 = vpack.c.b16 %v839, %v838
        %v860 = vpack.c.b16 %v841, %v840
        %v861 = vpack.c.b16 %v843, %v842
        %v862 = vpack.c.b16 %v845, %v844
        %v863 = vpack.c.b16 %v847, %v846
        %880 = vmatprep.subr.bf16.mxu0 0
        %881 = vmatpush1.bf16.msra.mxu0 %v855
        %882 = vmatprep.subr.bf16.mxu0 0
        %883 = vmatpush1.bf16.msra.mxu0 %v854
        %884 = vmatprep.subr.bf16.mxu0 0
        %885 = vmatpush1.bf16.msra.mxu0 %v853
        %886 = vmatprep.subr.bf16.mxu0 0
        %887 = vmatpush1.bf16.msra.mxu0 %v852
        %888 = vmatprep.subr.bf16.mxu0 0
        %889 = vmatpush1.bf16.msra.mxu0 %v851
        %890 = vmatprep.subr.bf16.mxu0 0
        %891 = vmatpush1.bf16.msra.mxu0 %v850
        %892 = vmatprep.subr.bf16.mxu0 0
        %893 = vmatpush1.bf16.msra.mxu0 %v849
        %894 = vmatprep.subr.bf16.mxu0 0
        %895 = vmatpush1.bf16.msra.mxu0 %v848
        %896 = vmatprep.subr.bf16.mxu0 0
        %897 = vmatpush2.bf16.msra.mxu0 %v863
        %898 = vmatprep.subr.bf16.mxu0 0
        %899 = vmatpush2.bf16.msra.mxu0 %v862
        %900 = vmatprep.subr.bf16.mxu0 0
        %901 = vmatpush2.bf16.msra.mxu0 %v861
        %902 = vmatprep.subr.bf16.mxu0 0
        %903 = vmatpush2.bf16.msra.mxu0 %v860
        %904 = vmatprep.subr.bf16.mxu0 0
        %905 = vmatpush2.bf16.msra.mxu0 %v859
        %906 = vmatprep.subr.bf16.mxu0 0
        %907 = vmatpush2.bf16.msra.mxu0 %v858
        %908 = vmatprep.subr.bf16.mxu0 0
        %909 = vmatpush2.bf16.msra.mxu0 %v857
        %910 = vmatprep.subr.bf16.mxu0 0
        %911 = vmatpush2.bf16.msra.mxu0 %v856
        %912 = vmatprep.mubr.bf16.mxu0 %v730
        %913 = vmatmul.mubr.bf16.gmra.mxu0 %v729
        %v914 = vpop.f32.mrf.mxu0
        %v915 = vadd.f32 %v782, %v914
        %v916 = vpop.f32.mrf.mxu0
        %v917 = vpop.f32.mrf.mxu0
        %v918 = vadd.f32 %v782, %v917
        %v919 = vpop.f32.mrf.mxu0
        %920 = vmatprep.mubr.bf16.mxu0 %v732
        %921 = vmatmul.mubr.bf16.gmra.mxu0 %v731
        %v922 = vpop.f32.mrf.mxu0
        %v923 = vadd.f32 %v782, %v922
        %v924 = vpop.f32.mrf.mxu0
        %v925 = vpop.f32.mrf.mxu0
        %v926 = vadd.f32 %v782, %v925
        %v927 = vpop.f32.mrf.mxu0
        %928 = vmatprep.mubr.bf16.mxu0 %v734
        %929 = vmatmul.mubr.bf16.gmra.mxu0 %v733
        %v930 = vpop.f32.mrf.mxu0
        %v931 = vadd.f32 %v782, %v930
        %v932 = vpop.f32.mrf.mxu0
        %v933 = vpop.f32.mrf.mxu0
        %v934 = vadd.f32 %v782, %v933
        %v935 = vpop.f32.mrf.mxu0
        %936 = vmatprep.mubr.bf16.mxu0 %v736
        %937 = vmatmul.mubr.bf16.gmra.mxu0 %v735
        %v938 = vpop.f32.mrf.mxu0
        %v939 = vadd.f32 %v782, %v938
        %v940 = vpop.f32.mrf.mxu0
        %v941 = vpop.f32.mrf.mxu0
        %v942 = vadd.f32 %v782, %v941
        %v943 = vpop.f32.mrf.mxu0
        %944 = vmatprep.mubr.bf16.mxu0 %v738
        %945 = vmatmul.mubr.bf16.gmra.mxu0 %v737
        %v946 = vpop.f32.mrf.mxu0
        %v947 = vadd.f32 %v782, %v946
        %v948 = vpop.f32.mrf.mxu0
        %v949 = vpop.f32.mrf.mxu0
        %v950 = vadd.f32 %v782, %v949
        %v951 = vpop.f32.mrf.mxu0
        %952 = vmatprep.mubr.bf16.mxu0 %v740
        %953 = vmatmul.mubr.bf16.gmra.mxu0 %v739
        %v954 = vpop.f32.mrf.mxu0
        %v955 = vadd.f32 %v782, %v954
        %v956 = vpop.f32.mrf.mxu0
        %v957 = vpop.f32.mrf.mxu0
        %v958 = vadd.f32 %v782, %v957
        %v959 = vpop.f32.mrf.mxu0
        %960 = vmatprep.mubr.bf16.mxu0 %v742
        %961 = vmatmul.mubr.bf16.gmra.mxu0 %v741
        %v962 = vpop.f32.mrf.mxu0
        %v963 = vadd.f32 %v782, %v962
        %v964 = vpop.f32.mrf.mxu0
        %v965 = vpop.f32.mrf.mxu0
        %v966 = vadd.f32 %v782, %v965
        %v967 = vpop.f32.mrf.mxu0
        %968 = vmatprep.mubr.bf16.mxu0 %v744
        %969 = vmatmul.mubr.bf16.gmra.mxu0 %v743
        %v970 = vpop.f32.mrf.mxu0
        %v971 = vadd.f32 %v782, %v970
        %v972 = vpop.f32.mrf.mxu0
        %v973 = vpop.f32.mrf.mxu0
        %v974 = vadd.f32 %v782, %v973
        %v975 = vpop.f32.mrf.mxu0
        %976 = vdwg.mxu0
        %v977 = vmax.f32 %v915, 0.0
        %v978 = vmax.f32 %v918, 0.0
        %v979 = vmax.f32 %v923, 0.0
        %v980 = vmax.f32 %v926, 0.0
        %v981 = vmax.f32 %v931, 0.0
        %v982 = vmax.f32 %v934, 0.0
        %v983 = vmax.f32 %v939, 0.0
        %v984 = vmax.f32 %v942, 0.0
        %v985 = vmax.f32 %v947, 0.0
        %v986 = vmax.f32 %v950, 0.0
        %v987 = vmax.f32 %v955, 0.0
        %v988 = vmax.f32 %v958, 0.0
        %v989 = vmax.f32 %v963, 0.0
        %v990 = vmax.f32 %v966, 0.0
        %v991 = vmax.f32 %v971, 0.0
        %v992 = vmax.f32 %v974, 0.0
        %v993 = vpack.c.bf16 %v978, %v977
        %v994 = vpack.c.bf16 %v980, %v979
        %v995 = vpack.c.bf16 %v982, %v981
        %v996 = vpack.c.bf16 %v984, %v983
        %v997 = vpack.c.bf16 %v986, %v985
        %v998 = vpack.c.bf16 %v988, %v987
        %v999 = vpack.c.bf16 %v990, %v989
        %v1000 = vpack.c.bf16 %v992, %v991
        %v1001 = vld [vmem:[#allocation8] sm:$0xff]
        %v1002 = vld [vmem:[#allocation8 + $0x8] sm:$0xff]
        %v1003 = vld [vmem:[#allocation8 + $0x10] sm:$0xff]
        %v1004 = vld [vmem:[#allocation8 + $0x18] sm:$0xff]
        %v1005 = vld [vmem:[#allocation8 + $0x20] sm:$0xff]
        %v1006 = vld [vmem:[#allocation8 + $0x28] sm:$0xff]
        %v1007 = vld [vmem:[#allocation8 + $0x30] sm:$0xff]
        %v1008 = vld [vmem:[#allocation8 + $0x38] sm:$0xff]
        %v1009 = vld [vmem:[#allocation8 + $0x40] sm:$0xff]
        %v1010 = vld [vmem:[#allocation8 + $0x48] sm:$0xff]
        %v1011 = vld [vmem:[#allocation8 + $0x50] sm:$0xff]
        %v1012 = vld [vmem:[#allocation8 + $0x58] sm:$0xff]
        %v1013 = vld [vmem:[#allocation8 + $0x60] sm:$0xff]
        %v1014 = vld [vmem:[#allocation8 + $0x68] sm:$0xff]
        %v1015 = vld [vmem:[#allocation8 + $0x70] sm:$0xff]
        %v1016 = vld [vmem:[#allocation8 + $0x78] sm:$0xff]
        %v1017 = vld [vmem:[%s6] sm:$0x3]
        %v1019 = vlaneseq
        %v1020 = vshrl.u32 %v1019, 7
        %v1021 = vsub.s32 0, %v1020
        %v1022 = vrot.slane %v1017, %v1021
        %v1023 = vlaneseq
        %v1024 = vshrl.u32 %v1023, 7
        %v1025 = vsub.s32 1, %v1024
        %v1026 = vrot.slane %v1017, %v1025
        %v1045 = vunpack.c.l.b16 %v1001
        %v1046 = vunpack.c.h.b16 %v1001
        %v1047 = vunpack.c.l.b16 %v1002
        %v1048 = vunpack.c.h.b16 %v1002
        %v1049 = vunpack.c.l.b16 %v1003
        %v1050 = vunpack.c.h.b16 %v1003
        %v1051 = vunpack.c.l.b16 %v1004
        %v1052 = vunpack.c.h.b16 %v1004
        %v1053 = vunpack.c.l.b16 %v1005
        %v1054 = vunpack.c.h.b16 %v1005
        %v1055 = vunpack.c.l.b16 %v1006
        %v1056 = vunpack.c.h.b16 %v1006
        %v1057 = vunpack.c.l.b16 %v1007
        %v1058 = vunpack.c.h.b16 %v1007
        %v1059 = vunpack.c.l.b16 %v1008
        %v1060 = vunpack.c.h.b16 %v1008
        %v1061 = vunpack.c.l.b16 %v1009
        %v1062 = vunpack.c.h.b16 %v1009
        %v1063 = vunpack.c.l.b16 %v1010
        %v1064 = vunpack.c.h.b16 %v1010
        %v1065 = vunpack.c.l.b16 %v1011
        %v1066 = vunpack.c.h.b16 %v1011
        %v1067 = vunpack.c.l.b16 %v1012
        %v1068 = vunpack.c.h.b16 %v1012
        %v1069 = vunpack.c.l.b16 %v1013
        %v1070 = vunpack.c.h.b16 %v1013
        %v1071 = vunpack.c.l.b16 %v1014
        %v1072 = vunpack.c.h.b16 %v1014
        %v1073 = vunpack.c.l.b16 %v1015
        %v1074 = vunpack.c.h.b16 %v1015
        %v1075 = vunpack.c.l.b16 %v1016
        %v1076 = vunpack.c.h.b16 %v1016
        %v1077 = vpack.c.b16 %v1047, %v1045
        %v1078 = vpack.c.b16 %v1048, %v1046
        %v1079 = vpack.c.b16 %v1051, %v1049
        %v1080 = vpack.c.b16 %v1052, %v1050
        %v1081 = vpack.c.b16 %v1055, %v1053
        %v1082 = vpack.c.b16 %v1056, %v1054
        %v1083 = vpack.c.b16 %v1059, %v1057
        %v1084 = vpack.c.b16 %v1060, %v1058
        %v1085 = vpack.c.b16 %v1063, %v1061
        %v1086 = vpack.c.b16 %v1064, %v1062
        %v1087 = vpack.c.b16 %v1067, %v1065
        %v1088 = vpack.c.b16 %v1068, %v1066
        %v1089 = vpack.c.b16 %v1071, %v1069
        %v1090 = vpack.c.b16 %v1072, %v1070
        %v1091 = vpack.c.b16 %v1075, %v1073
        %v1092 = vpack.c.b16 %v1076, %v1074
        %1109 = vmatprep.subr.bf16.mxu0 %v1092
        %1110 = vmatpush1.bf16.msra.mxu0 %v1091
        %1111 = vmatprep.subr.bf16.mxu0 %v1090
        %1112 = vmatpush1.bf16.msra.mxu0 %v1089
        %1113 = vmatprep.subr.bf16.mxu0 %v1088
        %1114 = vmatpush1.bf16.msra.mxu0 %v1087
        %1115 = vmatprep.subr.bf16.mxu0 %v1086
        %1116 = vmatpush1.bf16.msra.mxu0 %v1085
        %1117 = vmatprep.subr.bf16.mxu0 %v1084
        %1118 = vmatpush1.bf16.msra.mxu0 %v1083
        %1119 = vmatprep.subr.bf16.mxu0 %v1082
        %1120 = vmatpush1.bf16.msra.mxu0 %v1081
        %1121 = vmatprep.subr.bf16.mxu0 %v1080
        %1122 = vmatpush1.bf16.msra.mxu0 %v1079
        %1123 = vmatprep.subr.bf16.mxu0 %v1078
        %1124 = vmatpush1.bf16.msra.mxu0 %v1077
        %1125 = vmatprep.subr.bf16.mxu0 0
        %1126 = vmatpush2.bf16.msra.mxu0 0
        %1127 = vmatprep.subr.bf16.mxu0 0
        %1128 = vmatpush2.bf16.msra.mxu0 0
        %1129 = vmatprep.subr.bf16.mxu0 0
        %1130 = vmatpush2.bf16.msra.mxu0 0
        %1131 = vmatprep.subr.bf16.mxu0 0
        %1132 = vmatpush2.bf16.msra.mxu0 0
        %1133 = vmatprep.subr.bf16.mxu0 0
        %1134 = vmatpush2.bf16.msra.mxu0 0
        %1135 = vmatprep.subr.bf16.mxu0 0
        %1136 = vmatpush2.bf16.msra.mxu0 0
        %1137 = vmatprep.subr.bf16.mxu0 0
        %1138 = vmatpush2.bf16.msra.mxu0 0
        %1139 = vmatprep.subr.bf16.mxu0 0
        %1140 = vmatpush2.bf16.msra.mxu0 0
        %1141 = vmatprep.mubr.bf16.mxu0 0
        %1142 = vmatmul.mubr.bf16.gmra.mxu0 %v993
        %v1143 = vpop.f32.mrf.mxu0
        %v1144 = vadd.f32 %v1022, %v1143
        %v1145 = vpop.f32.mrf.mxu0
        %v1146 = vadd.f32 %v1026, %v1145
        %v1147 = vpop.f32.mrf.mxu0
        %v1148 = vadd.f32 %v1022, %v1147
        %v1149 = vpop.f32.mrf.mxu0
        %v1150 = vadd.f32 %v1026, %v1149
        %1151 = vmatprep.mubr.bf16.mxu0 0
        %1152 = vmatmul.mubr.bf16.gmra.mxu0 %v994
        %v1153 = vpop.f32.mrf.mxu0
        %v1154 = vadd.f32 %v1022, %v1153
        %v1155 = vpop.f32.mrf.mxu0
        %v1156 = vadd.f32 %v1026, %v1155
        %v1157 = vpop.f32.mrf.mxu0
        %v1158 = vadd.f32 %v1022, %v1157
        %v1159 = vpop.f32.mrf.mxu0
        %v1160 = vadd.f32 %v1026, %v1159
        %1161 = vmatprep.mubr.bf16.mxu0 0
        %1162 = vmatmul.mubr.bf16.gmra.mxu0 %v995
        %v1163 = vpop.f32.mrf.mxu0
        %v1164 = vadd.f32 %v1022, %v1163
        %v1165 = vpop.f32.mrf.mxu0
        %v1166 = vadd.f32 %v1026, %v1165
        %v1167 = vpop.f32.mrf.mxu0
        %v1168 = vadd.f32 %v1022, %v1167
        %v1169 = vpop.f32.mrf.mxu0
        %v1170 = vadd.f32 %v1026, %v1169
        %1171 = vmatprep.mubr.bf16.mxu0 0
        %1172 = vmatmul.mubr.bf16.gmra.mxu0 %v996
        %v1173 = vpop.f32.mrf.mxu0
        %v1174 = vadd.f32 %v1022, %v1173
        %v1175 = vpop.f32.mrf.mxu0
        %v1176 = vadd.f32 %v1026, %v1175
        %v1177 = vpop.f32.mrf.mxu0
        %v1178 = vadd.f32 %v1022, %v1177
        %v1179 = vpop.f32.mrf.mxu0
        %v1180 = vadd.f32 %v1026, %v1179
        %1181 = vmatprep.mubr.bf16.mxu0 0
        %1182 = vmatmul.mubr.bf16.gmra.mxu0 %v997
        %v1183 = vpop.f32.mrf.mxu0
        %v1184 = vadd.f32 %v1022, %v1183
        %v1185 = vpop.f32.mrf.mxu0
        %v1186 = vadd.f32 %v1026, %v1185
        %v1187 = vpop.f32.mrf.mxu0
        %v1188 = vadd.f32 %v1022, %v1187
        %v1189 = vpop.f32.mrf.mxu0
        %v1190 = vadd.f32 %v1026, %v1189
        %1191 = vmatprep.mubr.bf16.mxu0 0
        %1192 = vmatmul.mubr.bf16.gmra.mxu0 %v998
        %v1193 = vpop.f32.mrf.mxu0
        %v1194 = vadd.f32 %v1022, %v1193
        %v1195 = vpop.f32.mrf.mxu0
        %v1196 = vadd.f32 %v1026, %v1195
        %v1197 = vpop.f32.mrf.mxu0
        %v1198 = vadd.f32 %v1022, %v1197
        %v1199 = vpop.f32.mrf.mxu0
        %v1200 = vadd.f32 %v1026, %v1199
        %1201 = vmatprep.mubr.bf16.mxu0 0
        %1202 = vmatmul.mubr.bf16.gmra.mxu0 %v999
        %v1203 = vpop.f32.mrf.mxu0
        %v1204 = vadd.f32 %v1022, %v1203
        %v1205 = vpop.f32.mrf.mxu0
        %v1206 = vadd.f32 %v1026, %v1205
        %v1207 = vpop.f32.mrf.mxu0
        %v1208 = vadd.f32 %v1022, %v1207
        %v1209 = vpop.f32.mrf.mxu0
        %v1210 = vadd.f32 %v1026, %v1209
        %1211 = vmatprep.mubr.bf16.mxu0 0
        %1212 = vmatmul.mubr.bf16.gmra.mxu0 %v1000
        %v1213 = vpop.f32.mrf.mxu0
        %v1214 = vadd.f32 %v1022, %v1213
        %v1215 = vpop.f32.mrf.mxu0
        %v1216 = vadd.f32 %v1026, %v1215
        %v1217 = vpop.f32.mrf.mxu0
        %v1218 = vadd.f32 %v1022, %v1217
        %v1219 = vpop.f32.mrf.mxu0
        %v1220 = vadd.f32 %v1026, %v1219
        %1221 = vdwg.mxu0
        %v1222 = vmax.f32 %v1144, 0.0
        %v1223 = vmax.f32 %v1146, 0.0
        %v1224 = vmax.f32 %v1148, 0.0
        %v1225 = vmax.f32 %v1150, 0.0
        %v1226 = vmax.f32 %v1154, 0.0
        %v1227 = vmax.f32 %v1156, 0.0
        %v1228 = vmax.f32 %v1158, 0.0
        %v1229 = vmax.f32 %v1160, 0.0
        %v1230 = vmax.f32 %v1164, 0.0
        %v1231 = vmax.f32 %v1166, 0.0
        %v1232 = vmax.f32 %v1168, 0.0
        %v1233 = vmax.f32 %v1170, 0.0
        %v1234 = vmax.f32 %v1174, 0.0
        %v1235 = vmax.f32 %v1176, 0.0
        %v1236 = vmax.f32 %v1178, 0.0
        %v1237 = vmax.f32 %v1180, 0.0
        %v1238 = vmax.f32 %v1184, 0.0
        %v1239 = vmax.f32 %v1186, 0.0
        %v1240 = vmax.f32 %v1188, 0.0
        %v1241 = vmax.f32 %v1190, 0.0
        %v1242 = vmax.f32 %v1194, 0.0
        %v1243 = vmax.f32 %v1196, 0.0
        %v1244 = vmax.f32 %v1198, 0.0
        %v1245 = vmax.f32 %v1200, 0.0
        %v1246 = vmax.f32 %v1204, 0.0
        %v1247 = vmax.f32 %v1206, 0.0
        %v1248 = vmax.f32 %v1208, 0.0
        %v1249 = vmax.f32 %v1210, 0.0
        %v1250 = vmax.f32 %v1214, 0.0
        %v1251 = vmax.f32 %v1216, 0.0
        %v1252 = vmax.f32 %v1218, 0.0
        %v1253 = vmax.f32 %v1220, 0.0
        %v1254 = vpack.c.bf16 %v1224, %v1222
        %v1255 = vpack.c.bf16 %v1225, %v1223
        %v1256 = vpack.c.bf16 %v1228, %v1226
        %v1257 = vpack.c.bf16 %v1229, %v1227
        %v1258 = vpack.c.bf16 %v1232, %v1230
        %v1259 = vpack.c.bf16 %v1233, %v1231
        %v1260 = vpack.c.bf16 %v1236, %v1234
        %v1261 = vpack.c.bf16 %v1237, %v1235
        %v1262 = vpack.c.bf16 %v1240, %v1238
        %v1263 = vpack.c.bf16 %v1241, %v1239
        %v1264 = vpack.c.bf16 %v1244, %v1242
        %v1265 = vpack.c.bf16 %v1245, %v1243
        %v1266 = vpack.c.bf16 %v1248, %v1246
        %v1267 = vpack.c.bf16 %v1249, %v1247
        %v1268 = vpack.c.bf16 %v1252, %v1250
        %v1269 = vpack.c.bf16 %v1253, %v1251
        %v1270 = vld [vmem:[#allocation10] sm:$0xf]
        %v1271 = vld [vmem:[#allocation10 + $0x4] sm:$0xf]
        %v1272 = vld [vmem:[#allocation10 + $0x8] sm:$0xf]
        %v1273 = vld [vmem:[#allocation10 + $0xc] sm:$0xf]
        %v1274 = vld [vmem:[#allocation10 + $0x10] sm:$0xf]
        %v1275 = vld [vmem:[#allocation10 + $0x14] sm:$0xf]
        %v1276 = vld [vmem:[#allocation10 + $0x18] sm:$0xf]
        %v1277 = vld [vmem:[#allocation10 + $0x1c] sm:$0xf]
        %v1278 = vld [vmem:[#allocation10 + $0x20] sm:$0xf]
        %v1279 = vld [vmem:[#allocation10 + $0x24] sm:$0xf]
        %v1280 = vld [vmem:[#allocation10 + $0x28] sm:$0xf]
        %v1281 = vld [vmem:[#allocation10 + $0x2c] sm:$0xf]
        %v1282 = vld [vmem:[#allocation10 + $0x30] sm:$0xf]
        %v1283 = vld [vmem:[#allocation10 + $0x34] sm:$0xf]
        %v1284 = vld [vmem:[#allocation10 + $0x38] sm:$0xf]
        %v1285 = vld [vmem:[#allocation10 + $0x3c] sm:$0xf]
        %v1286 = vld [vmem:[#allocation10 + $0x40] sm:$0xf]
        %v1287 = vld [vmem:[#allocation10 + $0x44] sm:$0xf]
        %v1288 = vld [vmem:[#allocation10 + $0x48] sm:$0xf]
        %v1289 = vld [vmem:[#allocation10 + $0x4c] sm:$0xf]
        %v1290 = vld [vmem:[#allocation10 + $0x50] sm:$0xf]
        %v1291 = vld [vmem:[#allocation10 + $0x54] sm:$0xf]
        %v1292 = vld [vmem:[#allocation10 + $0x58] sm:$0xf]
        %v1293 = vld [vmem:[#allocation10 + $0x5c] sm:$0xf]
        %v1294 = vld [vmem:[#allocation10 + $0x60] sm:$0xf]
        %v1295 = vld [vmem:[#allocation10 + $0x64] sm:$0xf]
        %v1296 = vld [vmem:[#allocation10 + $0x68] sm:$0xf]
        %v1297 = vld [vmem:[#allocation10 + $0x6c] sm:$0xf]
        %v1298 = vld [vmem:[#allocation10 + $0x70] sm:$0xf]
        %v1299 = vld [vmem:[#allocation10 + $0x74] sm:$0xf]
        %v1300 = vld [vmem:[#allocation10 + $0x78] sm:$0xf]
        %v1301 = vld [vmem:[#allocation10 + $0x7c] sm:$0xf]
        %v1302 = vld [vmem:[%s8] sm:$0x1]
        %v1304 = vlaneseq
        %v1305 = vshrl.u32 %v1304, 7
        %v1306 = vsub.s32 0, %v1305
        %v1307 = vrot.slane %v1302, %v1306
        %v1341 = vunpack.c.l.b16 %v1270
        %v1342 = vunpack.c.l.b16 %v1271
        %v1343 = vunpack.c.l.b16 %v1272
        %v1344 = vunpack.c.l.b16 %v1273
        %v1345 = vunpack.c.l.b16 %v1274
        %v1346 = vunpack.c.l.b16 %v1275
        %v1347 = vunpack.c.l.b16 %v1276
        %v1348 = vunpack.c.l.b16 %v1277
        %v1349 = vunpack.c.l.b16 %v1278
        %v1350 = vunpack.c.l.b16 %v1279
        %v1351 = vunpack.c.l.b16 %v1280
        %v1352 = vunpack.c.l.b16 %v1281
        %v1353 = vunpack.c.l.b16 %v1282
        %v1354 = vunpack.c.l.b16 %v1283
        %v1355 = vunpack.c.l.b16 %v1284
        %v1356 = vunpack.c.l.b16 %v1285
        %v1357 = vunpack.c.l.b16 %v1286
        %v1358 = vunpack.c.l.b16 %v1287
        %v1359 = vunpack.c.l.b16 %v1288
        %v1360 = vunpack.c.l.b16 %v1289
        %v1361 = vunpack.c.l.b16 %v1290
        %v1362 = vunpack.c.l.b16 %v1291
        %v1363 = vunpack.c.l.b16 %v1292
        %v1364 = vunpack.c.l.b16 %v1293
        %v1365 = vunpack.c.l.b16 %v1294
        %v1366 = vunpack.c.l.b16 %v1295
        %v1367 = vunpack.c.l.b16 %v1296
        %v1368 = vunpack.c.l.b16 %v1297
        %v1369 = vunpack.c.l.b16 %v1298
        %v1370 = vunpack.c.l.b16 %v1299
        %v1371 = vunpack.c.l.b16 %v1300
        %v1372 = vunpack.c.l.b16 %v1301
        %v1373 = vpack.c.b16 %v1342, %v1341
        %v1374 = vpack.c.b16 %v1344, %v1343
        %v1375 = vpack.c.b16 %v1346, %v1345
        %v1376 = vpack.c.b16 %v1348, %v1347
        %v1377 = vpack.c.b16 %v1350, %v1349
        %v1378 = vpack.c.b16 %v1352, %v1351
        %v1379 = vpack.c.b16 %v1354, %v1353
        %v1380 = vpack.c.b16 %v1356, %v1355
        %v1381 = vpack.c.b16 %v1358, %v1357
        %v1382 = vpack.c.b16 %v1360, %v1359
        %v1383 = vpack.c.b16 %v1362, %v1361
        %v1384 = vpack.c.b16 %v1364, %v1363
        %v1385 = vpack.c.b16 %v1366, %v1365
        %v1386 = vpack.c.b16 %v1368, %v1367
        %v1387 = vpack.c.b16 %v1370, %v1369
        %v1388 = vpack.c.b16 %v1372, %v1371
        %1405 = vmatprep.subr.bf16.mxu0 0
        %1406 = vmatpush1.bf16.msra.mxu0 %v1380
        %1407 = vmatprep.subr.bf16.mxu0 0
        %1408 = vmatpush1.bf16.msra.mxu0 %v1379
        %1409 = vmatprep.subr.bf16.mxu0 0
        %1410 = vmatpush1.bf16.msra.mxu0 %v1378
        %1411 = vmatprep.subr.bf16.mxu0 0
        %1412 = vmatpush1.bf16.msra.mxu0 %v1377
        %1413 = vmatprep.subr.bf16.mxu0 0
        %1414 = vmatpush1.bf16.msra.mxu0 %v1376
        %1415 = vmatprep.subr.bf16.mxu0 0
        %1416 = vmatpush1.bf16.msra.mxu0 %v1375
        %1417 = vmatprep.subr.bf16.mxu0 0
        %1418 = vmatpush1.bf16.msra.mxu0 %v1374
        %1419 = vmatprep.subr.bf16.mxu0 0
        %1420 = vmatpush1.bf16.msra.mxu0 %v1373
        %1421 = vmatprep.subr.bf16.mxu0 0
        %1422 = vmatpush2.bf16.msra.mxu0 %v1388
        %1423 = vmatprep.subr.bf16.mxu0 0
        %1424 = vmatpush2.bf16.msra.mxu0 %v1387
        %1425 = vmatprep.subr.bf16.mxu0 0
        %1426 = vmatpush2.bf16.msra.mxu0 %v1386
        %1427 = vmatprep.subr.bf16.mxu0 0
        %1428 = vmatpush2.bf16.msra.mxu0 %v1385
        %1429 = vmatprep.subr.bf16.mxu0 0
        %1430 = vmatpush2.bf16.msra.mxu0 %v1384
        %1431 = vmatprep.subr.bf16.mxu0 0
        %1432 = vmatpush2.bf16.msra.mxu0 %v1383
        %1433 = vmatprep.subr.bf16.mxu0 0
        %1434 = vmatpush2.bf16.msra.mxu0 %v1382
        %1435 = vmatprep.subr.bf16.mxu0 0
        %1436 = vmatpush2.bf16.msra.mxu0 %v1381
        %1437 = vmatprep.mubr.bf16.mxu0 %v1255
        %1438 = vmatmul.mubr.bf16.gmra.mxu0 %v1254
        %v1439 = vpop.f32.mrf.mxu0
        %v1440 = vadd.f32 %v1307, %v1439
        %v1441 = vpop.f32.mrf.mxu0
        %v1442 = vpop.f32.mrf.mxu0
        %v1443 = vadd.f32 %v1307, %v1442
        %v1444 = vpop.f32.mrf.mxu0
        %1445 = vmatprep.mubr.bf16.mxu0 %v1257
        %1446 = vmatmul.mubr.bf16.gmra.mxu0 %v1256
        %v1447 = vpop.f32.mrf.mxu0
        %v1448 = vadd.f32 %v1307, %v1447
        %v1449 = vpop.f32.mrf.mxu0
        %v1450 = vpop.f32.mrf.mxu0
        %v1451 = vadd.f32 %v1307, %v1450
        %v1452 = vpop.f32.mrf.mxu0
        %1453 = vmatprep.mubr.bf16.mxu0 %v1259
        %1454 = vmatmul.mubr.bf16.gmra.mxu0 %v1258
        %v1455 = vpop.f32.mrf.mxu0
        %v1456 = vadd.f32 %v1307, %v1455
        %v1457 = vpop.f32.mrf.mxu0
        %v1458 = vpop.f32.mrf.mxu0
        %v1459 = vadd.f32 %v1307, %v1458
        %v1460 = vpop.f32.mrf.mxu0
        %1461 = vmatprep.mubr.bf16.mxu0 %v1261
        %1462 = vmatmul.mubr.bf16.gmra.mxu0 %v1260
        %v1463 = vpop.f32.mrf.mxu0
        %v1464 = vadd.f32 %v1307, %v1463
        %v1465 = vpop.f32.mrf.mxu0
        %v1466 = vpop.f32.mrf.mxu0
        %v1467 = vadd.f32 %v1307, %v1466
        %v1468 = vpop.f32.mrf.mxu0
        %1469 = vmatprep.mubr.bf16.mxu0 %v1263
        %1470 = vmatmul.mubr.bf16.gmra.mxu0 %v1262
        %v1471 = vpop.f32.mrf.mxu0
        %v1472 = vadd.f32 %v1307, %v1471
        %v1473 = vpop.f32.mrf.mxu0
        %v1474 = vpop.f32.mrf.mxu0
        %v1475 = vadd.f32 %v1307, %v1474
        %v1476 = vpop.f32.mrf.mxu0
        %1477 = vmatprep.mubr.bf16.mxu0 %v1265
        %1478 = vmatmul.mubr.bf16.gmra.mxu0 %v1264
        %v1479 = vpop.f32.mrf.mxu0
        %v1480 = vadd.f32 %v1307, %v1479
        %v1481 = vpop.f32.mrf.mxu0
        %v1482 = vpop.f32.mrf.mxu0
        %v1483 = vadd.f32 %v1307, %v1482
        %v1484 = vpop.f32.mrf.mxu0
        %1485 = vmatprep.mubr.bf16.mxu0 %v1267
        %1486 = vmatmul.mubr.bf16.gmra.mxu0 %v1266
        %v1487 = vpop.f32.mrf.mxu0
        %v1488 = vadd.f32 %v1307, %v1487
        %v1489 = vpop.f32.mrf.mxu0
        %v1490 = vpop.f32.mrf.mxu0
        %v1491 = vadd.f32 %v1307, %v1490
        %v1492 = vpop.f32.mrf.mxu0
        %1493 = vmatprep.mubr.bf16.mxu0 %v1269
        %1494 = vmatmul.mubr.bf16.gmra.mxu0 %v1268
        %v1495 = vpop.f32.mrf.mxu0
        %v1496 = vadd.f32 %v1307, %v1495
        %v1497 = vpop.f32.mrf.mxu0
        %v1498 = vpop.f32.mrf.mxu0
        %v1499 = vadd.f32 %v1307, %v1498
        %v1500 = vpop.f32.mrf.mxu0
        %1501 = vdwg.mxu0
        %1502 = vst [vmem:[%s408] sm:$0xff] %v1440
        %1503 = vst [vmem:[%s408 + $0x8] sm:$0xff] %v1443
        %1504 = vst [vmem:[%s408 + $0x10] sm:$0xff] %v1448
        %1505 = vst [vmem:[%s408 + $0x18] sm:$0xff] %v1451
        %1506 = vst [vmem:[%s408 + $0x20] sm:$0xff] %v1456
        %1507 = vst [vmem:[%s408 + $0x28] sm:$0xff] %v1459
        %1508 = vst [vmem:[%s408 + $0x30] sm:$0xff] %v1464
        %1509 = vst [vmem:[%s408 + $0x38] sm:$0xff] %v1467
        %1510 = vst [vmem:[%s408 + $0x40] sm:$0xff] %v1472
        %1511 = vst [vmem:[%s408 + $0x48] sm:$0xff] %v1475
        %1512 = vst [vmem:[%s408 + $0x50] sm:$0xff] %v1480
        %1513 = vst [vmem:[%s408 + $0x58] sm:$0xff] %v1483
        %1514 = vst [vmem:[%s408 + $0x60] sm:$0xff] %v1488
        %1515 = vst [vmem:[%s408 + $0x68] sm:$0xff] %v1491
        %1516 = vst [vmem:[%s408 + $0x70] sm:$0xff] %v1496
        %1517 = vst [vmem:[%s408 + $0x78] sm:$0xff] %v1499
        %s1518 = sand.u32 %s230, 1
        %s1519 = scalar_lea.sflag [#allocation4], %s1518
        %s1520 = sand.u32 %s230, 1
        %s1521 = smul.addr %s1520, 128
        %s1522 = scalar_lea.vmem [#allocation11], %s1521
        // Predicated region
        $region77: #{tpu_custom_call.1} parent=55 // pred_check
          %p1523 = pneg %p240
        $region78: #{tpu_custom_call.1} parent=55 // pred_check_branch
          %1525 = sbr.rel (%p1523) target = $region80
        $region79: #{tpu_custom_call.1} parent=55 // pred_region
          %s1526 = smul.u32 16, %s28
          %s1528 = ssub.s32 2048, 2048
          %1529 = vsyncadd %s1519, %s1528
          %s1530 = smul.addr %s1526, 128
          %s1531 = scalar_lea.hbm %s9, %s1530
          %s1532 = sshll.u32 %s1522, 4
          %s1533 = int_to_ptr.vmem [resolvable:$true] %s1532
          %1538 = dma.vmem_to_hbm [thread:$0]  %s1533, 2048, %s1531, %s1519, 128, 128, 8
        $region80: #{tpu_custom_call.1} parent=55 // pred_fallthru
          _
      $region56: #{tpu_custom_call.1} parent=5 // pred_fallthru
        _
      %p1539 = scmp.le.s32.totalorder 2, %s23
      // Predicated region
      $region81: #{tpu_custom_call.1} parent=5 // pred_check
        %p1540 = pneg %p1539
      $region82: #{tpu_custom_call.1} parent=5 // pred_check_branch
        %1542 = sbr.rel (%p1540) target = $region84
      $region83: #{tpu_custom_call.1} parent=5 // pred_region
        %s1543 = ssub.s32 %s23, 2
        // Predicated region
        $region85: #{tpu_custom_call.1} parent=83 // pred_check
          %p1544 = pneg %p246
        $region86: #{tpu_custom_call.1} parent=83 // pred_check_branch
          %1546 = sbr.rel (%p1544) target = $region88
        $region87: #{tpu_custom_call.1} parent=83 // pred_region
          %s1547 = sand.u32 %s231, 1
          %s1548 = scalar_lea.sflag [#allocation4], %s1547
          %s1549 = sand.u32 %s231, 1
          %s1550 = smul.addr %s1549, 128
          %s1551 = scalar_lea.vmem [#allocation11], %s1550
          %1552 = dma.done %s1548, 2048
        $region88: #{tpu_custom_call.1} parent=83 // pred_fallthru
          _
      $region84: #{tpu_custom_call.1} parent=5 // pred_fallthru
        _
    $region6: #{tpu_custom_call.1} parent=1 // loop_footer
      %s27 = sadd.s32 1, %s23
    $region7: #{tpu_custom_call.1} parent=1 // loop_footer_branch
      %22 = sbr.rel target = $region3
    $region8: #{tpu_custom_call.1} parent=1 // loop_exit
      _
    %1553 = vsyncpa [#allocation3], 1
    %s1554 = scalar_lea.sflag [#allocation3], 1
    %1555 = vsyncpa %s1554, 1
    %1556 = vsyncpa [#allocation6], 1
    %1557 = vsyncpa [#allocation9], 1
    %1558 = vsyncpa [#allocation4], 1
    %s1559 = scalar_lea.sflag [#allocation4], 1
    %1560 = vsyncpa %s1559, 1

</llo_original>
